<compile_context>
chip_gen: v7x
topology: tpu7x:2x2x1
jax: 0.10.0
libtpu: 0.0.40
codegen_flags: <defaults>
</compile_context>

<pallas_src>
import functools

import jax
import jax.numpy as jnp
from jax.experimental import pallas as pl
from jax.experimental.pallas import tpu as pltpu


def pinn_kernel(xr_ref, w23_ref, w1b_ref, w4b_ref, o_ref, *, mxu_dtype):
    # xr_ref: (2, bm)  -- row 0 = r, row 1 = theta
    # w23_ref: (2, H, H), w1b_ref: (H, 5) = [W1(:,0:2) | b1 | b2 | b3]
    # w4b_ref: (2, H+1) = [W4 | b4], o_ref: (2, bm)
    H = w23_ref.shape[-1]

    xr = xr_ref[...]
    r = xr[0:1, :]                      # (1, bm)
    t = xr[1:2, :]                      # (1, bm)

    w1b = w1b_ref[...]                  # (H, 5)
    w1 = w1b[:, 0:2]
    b1 = w1b[:, 2:3]
    b2 = w1b[:, 3:4]
    b3 = w1b[:, 4:5]

    # Layer 1 (K=2): pure VPU broadcast-FMA -- a depth-2 MXU contraction
    # would be >98% systolic padding.
    h = jnp.tanh(w1[:, 0:1] * r + w1[:, 1:2] * t + b1)          # (H, bm)

    # Hidden layers on the MXU; batch lives on lanes so the bias add, tanh
    # and the final store are lane-dense.
    h = jnp.tanh(
        jnp.dot(w23_ref[0].astype(mxu_dtype), h.astype(mxu_dtype),
                preferred_element_type=jnp.float32) + b2)        # (H, bm)
    h = jnp.tanh(
        jnp.dot(w23_ref[1].astype(mxu_dtype), h.astype(mxu_dtype),
                preferred_element_type=jnp.float32) + b3)        # (H, bm)

    w4b = w4b_ref[...]                  # (2, H+1)
    out = (jnp.dot(w4b[:, 0:H].astype(mxu_dtype), h.astype(mxu_dtype),
                   preferred_element_type=jnp.float32)
           + w4b[:, H:H + 1])                                    # (2, bm)
    o_ref[...] = out.astype(o_ref.dtype)


def pinn_forward(r, theta, params, *, bm=2048, use_bf16=False):
    """r, theta: (N, 1) float32.  Returns (N, 2) float32."""
    N = r.shape[0]
    w1, b1, w2, b2, w3, b3, w4, b4 = params
    H = w1.shape[0]        # 50
    D_out = w4.shape[0]    # 2

    # Clamp the tile to the 128-rounded batch (no point computing a huge
    # padded tile for small N); keep it a multiple of 128 lanes.
    bm_eff = min(bm, ((N + 127) // 128) * 128)
    n_tiles = pl.cdiv(N, bm_eff)

    # Single stacked (2, N) input stream (the module's torch.cat, done once
    # in the wrapper); no padding -- Pallas handles the ragged last block.
    xr = jnp.concatenate(
        [r.reshape(1, N), theta.reshape(1, N)], axis=0).astype(jnp.float32)

    # Collapse the parameter streams: weights stay VMEM-resident via
    # constant index_maps, this just cuts per-step pipeline bookkeeping.
    w23 = jnp.stack([w2, w3], axis=0).astype(jnp.float32)            # (2,H,H)
    w1b = jnp.concatenate([w1, b1, b2, b3], axis=1).astype(jnp.float32)  # (H,5)
    w4b = jnp.concatenate([w4, b4], axis=1).astype(jnp.float32)      # (2,H+1)

    mxu_dtype = jnp.bfloat16 if use_bf16 else jnp.float32

    batch_spec = lambda rows: pl.BlockSpec((rows, bm_eff), lambda i: (0, i))
    const_spec = lambda shape: pl.BlockSpec(shape, lambda i: (0,) * len(shape))

    flops = 2 * N * (2 * H + H * H + H * H + H * D_out)
    transcendentals = 3 * H * N
    bytes_accessed = (4 * N * (2 + D_out)
                      + 4 * (2 * H * H + H * 5 + D_out * (H + 1)))

    out = pl.pallas_call(
        functools.partial(pinn_kernel, mxu_dtype=mxu_dtype),
        out_shape=jax.ShapeDtypeStruct((D_out, N), jnp.float32),
        grid_spec=pltpu.PrefetchScalarGridSpec(
            num_scalar_prefetch=0,
            grid=(n_tiles,),
            in_specs=[
                batch_spec(2),                 # xr   (2, bm)
                const_spec((2, H, H)),         # w23  (2, 50, 50)
                const_spec((H, 5)),            # w1b  (50, 5)
                const_spec((D_out, H + 1)),    # w4b  (2, 51)
            ],
            out_specs=batch_spec(D_out),       # out  (2, bm)
        ),
        compiler_params=pltpu.CompilerParams(
            dimension_semantics=("parallel",)),
        cost_estimate=pl.CostEstimate(
            flops=int(flops),
            transcendentals=int(transcendentals),
            bytes_accessed=int(bytes_accessed)),
    )(xr, w23, w1b, w4b)

    # (2, N) -> (N, 2): transpose once in the wrapper.
    return out.T


def init_params(key):
    """Deterministic init matching nn.Linear: weights (out, in), biases (out, 1)."""
    dims = [(2, 50), (50, 50), (50, 50), (50, 2)]
    params = []
    for (fan_in, fan_out) in dims:
        key, kw, kb = jax.random.split(key, 3)
        bound = 1.0 / jnp.sqrt(fan_in)
        w = jax.random.uniform(kw, (fan_out, fan_in), jnp.float32, -bound, bound)
        b = jax.random.uniform(kb, (fan_out, 1), jnp.float32, -bound, bound)
        params += [w, b]
    return tuple(params)


def pinn_ref(r, theta, params):
    """Pure-JAX reference (same math as the PyTorch module)."""
    w1, b1, w2, b2, w3, b3, w4, b4 = params
    x = jnp.concatenate([r, theta], axis=1)          # (N, 2)
    h = jnp.tanh(x @ w1.T + b1.T)
    h = jnp.tanh(h @ w2.T + b2.T)
    h = jnp.tanh(h @ w3.T + b3.T)
    return h @ w4.T + b4.T


if __name__ == "__main__":
    key = jax.random.PRNGKey(0)
    kp, kr, kt = jax.random.split(key, 3)

    params = init_params(kp)

    # Ragged batch (not a multiple of 128 lanes) to exercise edge-block handling.
    N = 1000
    r = jax.random.uniform(kr, (N, 1), jnp.float32)
    theta = jax.random.uniform(kt, (N, 1), jnp.float32) * 2.0 * jnp.pi

    out = pinn_forward(r, theta, params)             # f32 path (bf16 optional)
    out = jax.block_until_ready(out)

    ref = pinn_ref(r, theta, params)
    assert out.shape == (N, 2)
    assert jnp.allclose(out, ref, atol=1e-4, rtol=1e-4)

    print("KERNEL_OK")
</pallas_src>

<mosaic_0001>
module attributes {stable_mosaic.version = 11 : i64} {
  func.func @pinn_kernel(%arg0: i32, %arg1: memref<2x1024xf32, #tpu.memory_space<vmem>>, %arg2: memref<2x50x50xf32, #tpu.memory_space<vmem>>, %arg3: memref<50x5xf32, #tpu.memory_space<vmem>>, %arg4: memref<2x51xf32, #tpu.memory_space<vmem>>, %arg5: memref<2x1024xf32, #tpu.memory_space<vmem>>) attributes {dimension_semantics = [#tpu.dimension_semantics<parallel>], iteration_bounds = array<i64: 1>, scalar_prefetch = 0 : i64, scratch_operands = 0 : i64, tpu.core_type = #tpu.core_type<tc>, window_params = [{transform_indices = @transform_0, window_bounds = array<i64: 2, 1024>}, {pipeline_mode = #tpu.pipeline_mode<synchronous>, transform_indices = @transform_1, window_bounds = array<i64: 2, 50, 50>}, {pipeline_mode = #tpu.pipeline_mode<synchronous>, transform_indices = @transform_2, window_bounds = array<i64: 50, 5>}, {pipeline_mode = #tpu.pipeline_mode<synchronous>, transform_indices = @transform_3, window_bounds = array<i64: 2, 51>}, {transform_indices = @transform_4, window_bounds = array<i64: 2, 1024>}]} {
    %c0 = arith.constant 0 : index
    %c0_0 = arith.constant 0 : index
    %0 = vector.load %arg1[%c0, %c0_0] : memref<2x1024xf32, #tpu.memory_space<vmem>>, vector<2x1024xf32>
    %1 = vector.extract_strided_slice %0 {offsets = [0, 0], sizes = [1, 1024], strides = [1, 1]} : vector<2x1024xf32> to vector<1x1024xf32>
    %2 = vector.extract_strided_slice %0 {offsets = [1, 0], sizes = [1, 1024], strides = [1, 1]} : vector<2x1024xf32> to vector<1x1024xf32>
    %c0_1 = arith.constant 0 : index
    %c0_2 = arith.constant 0 : index
    %3 = vector.load %arg3[%c0_1, %c0_2] : memref<50x5xf32, #tpu.memory_space<vmem>>, vector<50x5xf32>
    %4 = vector.extract_strided_slice %3 {offsets = [0, 0], sizes = [50, 2], strides = [1, 1]} : vector<50x5xf32> to vector<50x2xf32>
    %5 = vector.extract_strided_slice %3 {offsets = [0, 2], sizes = [50, 1], strides = [1, 1]} : vector<50x5xf32> to vector<50x1xf32>
    %6 = vector.extract_strided_slice %3 {offsets = [0, 3], sizes = [50, 1], strides = [1, 1]} : vector<50x5xf32> to vector<50x1xf32>
    %7 = vector.extract_strided_slice %3 {offsets = [0, 4], sizes = [50, 1], strides = [1, 1]} : vector<50x5xf32> to vector<50x1xf32>
    %8 = vector.extract_strided_slice %4 {offsets = [0, 0], sizes = [50, 1], strides = [1, 1]} : vector<50x2xf32> to vector<50x1xf32>
    %9 = vector.broadcast %8 : vector<50x1xf32> to vector<50x1024xf32>
    %10 = vector.broadcast %1 : vector<1x1024xf32> to vector<50x1024xf32>
    %11 = arith.mulf %9, %10 : vector<50x1024xf32>
    %12 = vector.extract_strided_slice %4 {offsets = [0, 1], sizes = [50, 1], strides = [1, 1]} : vector<50x2xf32> to vector<50x1xf32>
    %13 = vector.broadcast %12 : vector<50x1xf32> to vector<50x1024xf32>
    %14 = vector.broadcast %2 : vector<1x1024xf32> to vector<50x1024xf32>
    %15 = arith.mulf %13, %14 : vector<50x1024xf32>
    %16 = arith.addf %11, %15 : vector<50x1024xf32>
    %17 = vector.broadcast %5 : vector<50x1xf32> to vector<50x1024xf32>
    %18 = arith.addf %16, %17 : vector<50x1024xf32>
    %19 = math.tanh %18 : vector<50x1024xf32>
    %c0_3 = arith.constant 0 : index
    %c0_4 = arith.constant 0 : index
    %c0_5 = arith.constant 0 : index
    %20 = vector.load %arg2[%c0_3, %c0_4, %c0_5] : memref<2x50x50xf32, #tpu.memory_space<vmem>>, vector<1x50x50xf32>
    %21 = vector.shape_cast %20 : vector<1x50x50xf32> to vector<50x50xf32>
    %cst = arith.constant dense<0.000000e+00> : vector<50x1024xf32>
    %22 = tpu.matmul %21, %19, %cst {dimension_numbers = #tpu.dot_dimension_numbers<[1], [0], [0], [1], [0, 0, 1, 1], [], []>} : vector<50x50xf32>, vector<50x1024xf32>, vector<50x1024xf32> -> vector<50x1024xf32>
    %23 = vector.broadcast %6 : vector<50x1xf32> to vector<50x1024xf32>
    %24 = arith.addf %22, %23 : vector<50x1024xf32>
    %25 = math.tanh %24 : vector<50x1024xf32>
    %c1 = arith.constant 1 : index
    %c0_6 = arith.constant 0 : index
    %c0_7 = arith.constant 0 : index
    %26 = vector.load %arg2[%c1, %c0_6, %c0_7] : memref<2x50x50xf32, #tpu.memory_space<vmem>>, vector<1x50x50xf32>
    %27 = vector.shape_cast %26 : vector<1x50x50xf32> to vector<50x50xf32>
    %cst_8 = arith.constant dense<0.000000e+00> : vector<50x1024xf32>
    %28 = tpu.matmul %27, %25, %cst_8 {dimension_numbers = #tpu.dot_dimension_numbers<[1], [0], [0], [1], [0, 0, 1, 1], [], []>} : vector<50x50xf32>, vector<50x1024xf32>, vector<50x1024xf32> -> vector<50x1024xf32>
    %29 = vector.broadcast %7 : vector<50x1xf32> to vector<50x1024xf32>
    %30 = arith.addf %28, %29 : vector<50x1024xf32>
    %31 = math.tanh %30 : vector<50x1024xf32>
    %c0_9 = arith.constant 0 : index
    %c0_10 = arith.constant 0 : index
    %32 = vector.load %arg4[%c0_9, %c0_10] : memref<2x51xf32, #tpu.memory_space<vmem>>, vector<2x51xf32>
    %33 = vector.extract_strided_slice %32 {offsets = [0, 0], sizes = [2, 50], strides = [1, 1]} : vector<2x51xf32> to vector<2x50xf32>
    %cst_11 = arith.constant dense<0.000000e+00> : vector<2x1024xf32>
    %34 = tpu.matmul %33, %31, %cst_11 {dimension_numbers = #tpu.dot_dimension_numbers<[1], [0], [0], [1], [0, 0, 1, 1], [], []>} : vector<2x50xf32>, vector<50x1024xf32>, vector<2x1024xf32> -> vector<2x1024xf32>
    %35 = vector.extract_strided_slice %32 {offsets = [0, 50], sizes = [2, 1], strides = [1, 1]} : vector<2x51xf32> to vector<2x1xf32>
    %36 = vector.broadcast %35 : vector<2x1xf32> to vector<2x1024xf32>
    %37 = arith.addf %34, %36 : vector<2x1024xf32>
    %c0_12 = arith.constant 0 : index
    %c0_13 = arith.constant 0 : index
    %38 = vector.load %arg5[%c0_12, %c0_13] : memref<2x1024xf32, #tpu.memory_space<vmem>>, vector<2x1024xf32>
    tpu.vector_store %arg5[%c0_12, %c0_13], %37 {strides = array<i32>} : memref<2x1024xf32, #tpu.memory_space<vmem>>, vector<2x1024xf32>,
    return
  }
  func.func @transform_0(%arg0: i32) -> (i32, i32) {
    %c0_i32 = arith.constant 0 : i32
    %c0_i32_0 = arith.constant 0 : i32
    return %c0_i32, %arg0 : i32, i32
  }
  func.func @transform_1(%arg0: i32) -> (i32, i32, i32) {
    %c0_i32 = arith.constant 0 : i32
    %c0_i32_0 = arith.constant 0 : i32
    %c0_i32_1 = arith.constant 0 : i32
    %c0_i32_2 = arith.constant 0 : i32
    return %c0_i32, %c0_i32_0, %c0_i32_1 : i32, i32, i32
  }
  func.func @transform_2(%arg0: i32) -> (i32, i32) {
    %c0_i32 = arith.constant 0 : i32
    %c0_i32_0 = arith.constant 0 : i32
    %c0_i32_1 = arith.constant 0 : i32
    return %c0_i32, %c0_i32_0 : i32, i32
  }
  func.func @transform_3(%arg0: i32) -> (i32, i32) {
    %c0_i32 = arith.constant 0 : i32
    %c0_i32_0 = arith.constant 0 : i32
    %c0_i32_1 = arith.constant 0 : i32
    return %c0_i32, %c0_i32_0 : i32, i32
  }
  func.func @transform_4(%arg0: i32) -> (i32, i32) {
    %c0_i32 = arith.constant 0 : i32
    %c0_i32_0 = arith.constant 0 : i32
    return %c0_i32, %arg0 : i32, i32
  }
}

</mosaic_0001>

<llo_original>
// kernel: tpu_custom_call.1
$region0: #{tpu_custom_call.1}
  #allocation0 [shape = 'u32[]', space=smem, size = 0x4, offset = 0x4, fixed_abs, tag = 'smem constant byte address 0x4 - core index']
  #allocation1 [shape = 'u32[144,128]{1,0:T(1,128)}', space=vmem, size = 0x12000, scoped, tag = 'internal scratch']
  %s0 = inlined_call_operand.vmem [shape: f32[2,1000], index: 0, kind: input, shape index: {}]
  %s1 = inlined_call_operand.vmem [shape: f32[2,50,50], index: 1, kind: input, shape index: {}]
  %s2 = inlined_call_operand.vmem [shape: f32[50,5], index: 2, kind: input, shape index: {}]
  %s3 = inlined_call_operand.vmem [shape: f32[2,51], index: 3, kind: input, shape index: {}]
  %s4 = inlined_call_operand.hbm [shape: f32[2,1000], index: 4, kind: output, shape index: {}]
  %s5 = sld [smem:[#allocation0]]
  $region26: #{tpu_custom_call.1} parent=0
    _
  %s7 = ssub.s32 1, %s5
  %s8 = scalar_select 0, %s7, %s5
  $region1: #{tpu_custom_call.1} parent=0
    #allocation2 [shape = 'u8[8192]{0}', space=vmem, size = 0x2000, scoped, tag = 'output window, operand 0, single buffered']
    #allocation3 [shape = 's32[1]{0}', space=sflag, size = 0x4, scoped, tag = 'scoped memory for tpu_custom_call.1']
    %9 = vsyncpa [#allocation3], 0
    // Predicated region
    $region2: #{tpu_custom_call.1} parent=1 // pred_check
      _
    $region3: #{tpu_custom_call.1} parent=1 // pred_check_branch
      %11 = sbr.rel (0) target = $region5
    $region4: #{tpu_custom_call.1} parent=1 // pred_region
      _
    $region5: #{tpu_custom_call.1} parent=1 // pred_fallthru
      _
    // Predicated region
    $region6: #{tpu_custom_call.1} parent=1 // pred_check
      _
    $region7: #{tpu_custom_call.1} parent=1 // pred_check_branch
      %13 = sbr.rel (0) target = $region9
    $region8: #{tpu_custom_call.1} parent=1 // pred_region
      _
    $region9: #{tpu_custom_call.1} parent=1 // pred_fallthru
      _
    // Predicated region
    $region10: #{tpu_custom_call.1} parent=1 // pred_check
      _
    $region11: #{tpu_custom_call.1} parent=1 // pred_check_branch
      %15 = sbr.rel (0) target = $region13
    $region12: #{tpu_custom_call.1} parent=1 // pred_region
      _
    $region13: #{tpu_custom_call.1} parent=1 // pred_fallthru
      _
    // Predicated region
    $region14: #{tpu_custom_call.1} parent=1 // pred_check
      _
    $region15: #{tpu_custom_call.1} parent=1 // pred_check_branch
      %17 = sbr.rel (0) target = $region17
    $region16: #{tpu_custom_call.1} parent=1 // pred_region
      _
    $region17: #{tpu_custom_call.1} parent=1 // pred_fallthru
      _
    %v18 = vld [vmem:[%s0] sm:$0xff]
    %v19 = vld [vmem:[%s0 + $0x8] sm:$0xff]
    %v20 = vld [vmem:[%s2] sm:$0xff]
    %v21 = vld [vmem:[%s2 + $0x8] sm:$0xff]
    %v22 = vld [vmem:[%s2 + $0x10] sm:$0xff]
    %v23 = vld [vmem:[%s2 + $0x18] sm:$0xff]
    %v24 = vld [vmem:[%s2 + $0x20] sm:$0xff]
    %v25 = vld [vmem:[%s2 + $0x28] sm:$0xff]
    %v26 = vld [vmem:[%s2 + $0x30] sm:$0x3]
    %28 = vset.pattern.permute.xlu0 0
    %29 = vperm.xlu0 %28, %v20
    %v30 = vpop.permute.xlu0 %29
    %33 = vset.pattern.permute.xlu0 0
    %34 = vperm.xlu0 %33, %v21
    %v35 = vpop.permute.xlu0 %34
    %38 = vset.pattern.permute.xlu0 0
    %39 = vperm.xlu0 %38, %v22
    %v40 = vpop.permute.xlu0 %39
    %43 = vset.pattern.permute.xlu0 0
    %44 = vperm.xlu0 %43, %v23
    %v45 = vpop.permute.xlu0 %44
    %48 = vset.pattern.permute.xlu0 0
    %49 = vperm.xlu0 %48, %v24
    %v50 = vpop.permute.xlu0 %49
    %53 = vset.pattern.permute.xlu0 0
    %54 = vperm.xlu0 %53, %v25
    %v55 = vpop.permute.xlu0 %54
    %58 = vset.pattern.permute.xlu0 0
    %59 = vperm.xlu0 %58, %v26
    %v60 = vpop.permute.xlu0 %59
    %v64 = vlaneseq
    %v65 = vshrl.u32 %v64, 7
    %v66 = vsub.s32 0, %v65
    %v67 = vrot.slane %v18, %v66
    %v68 = vlaneseq
    %v69 = vshrl.u32 %v68, 7
    %v70 = vsub.s32 2, %v69
    %v71 = vrot.slane %v18, %v70
    %v72 = vlaneseq
    %v73 = vshrl.u32 %v72, 7
    %v74 = vsub.s32 4, %v73
    %v75 = vrot.slane %v18, %v74
    %v76 = vlaneseq
    %v77 = vshrl.u32 %v76, 7
    %v78 = vsub.s32 6, %v77
    %v79 = vrot.slane %v18, %v78
    %v80 = vlaneseq
    %v81 = vshrl.u32 %v80, 7
    %v82 = vsub.s32 0, %v81
    %v83 = vrot.slane %v19, %v82
    %v84 = vlaneseq
    %v85 = vshrl.u32 %v84, 7
    %v86 = vsub.s32 2, %v85
    %v87 = vrot.slane %v19, %v86
    %v88 = vlaneseq
    %v89 = vshrl.u32 %v88, 7
    %v90 = vsub.s32 4, %v89
    %v91 = vrot.slane %v19, %v90
    %v92 = vlaneseq
    %v93 = vshrl.u32 %v92, 7
    %v94 = vsub.s32 6, %v93
    %v95 = vrot.slane %v19, %v94
    %v104 = vlaneseq
    %v105 = vshrl.u32 %v104, 7
    %v106 = vsub.s32 0, %v105
    %v107 = vrot.slane %v67, %v106
    %v108 = vlaneseq
    %v109 = vshrl.u32 %v108, 7
    %v110 = vsub.s32 0, %v109
    %v111 = vrot.slane %v71, %v110
    %v112 = vlaneseq
    %v113 = vshrl.u32 %v112, 7
    %v114 = vsub.s32 0, %v113
    %v115 = vrot.slane %v75, %v114
    %v116 = vlaneseq
    %v117 = vshrl.u32 %v116, 7
    %v118 = vsub.s32 0, %v117
    %v119 = vrot.slane %v79, %v118
    %v120 = vlaneseq
    %v121 = vshrl.u32 %v120, 7
    %v122 = vsub.s32 0, %v121
    %v123 = vrot.slane %v83, %v122
    %v124 = vlaneseq
    %v125 = vshrl.u32 %v124, 7
    %v126 = vsub.s32 0, %v125
    %v127 = vrot.slane %v87, %v126
    %v128 = vlaneseq
    %v129 = vshrl.u32 %v128, 7
    %v130 = vsub.s32 0, %v129
    %v131 = vrot.slane %v91, %v130
    %v132 = vlaneseq
    %v133 = vshrl.u32 %v132, 7
    %v134 = vsub.s32 0, %v133
    %v135 = vrot.slane %v95, %v134
    %v136 = vmul.f32 %v30, %v107
    %v137 = vmul.f32 %v30, %v111
    %v138 = vmul.f32 %v30, %v115
    %v139 = vmul.f32 %v30, %v119
    %v140 = vmul.f32 %v30, %v123
    %v141 = vmul.f32 %v30, %v127
    %v142 = vmul.f32 %v30, %v131
    %v143 = vmul.f32 %v30, %v135
    %v144 = vmul.f32 %v35, %v107
    %v145 = vmul.f32 %v35, %v111
    %v146 = vmul.f32 %v35, %v115
    %v147 = vmul.f32 %v35, %v119
    %v148 = vmul.f32 %v35, %v123
    %v149 = vmul.f32 %v35, %v127
    %v150 = vmul.f32 %v35, %v131
    %v151 = vmul.f32 %v35, %v135
    %v152 = vmul.f32 %v40, %v107
    %v153 = vmul.f32 %v40, %v111
    %v154 = vmul.f32 %v40, %v115
    %v155 = vmul.f32 %v40, %v119
    %v156 = vmul.f32 %v40, %v123
    %v157 = vmul.f32 %v40, %v127
    %v158 = vmul.f32 %v40, %v131
    %v159 = vmul.f32 %v40, %v135
    %v160 = vmul.f32 %v45, %v107
    %v161 = vmul.f32 %v45, %v111
    %v162 = vmul.f32 %v45, %v115
    %v163 = vmul.f32 %v45, %v119
    %v164 = vmul.f32 %v45, %v123
    %v165 = vmul.f32 %v45, %v127
    %v166 = vmul.f32 %v45, %v131
    %v167 = vmul.f32 %v45, %v135
    %v168 = vmul.f32 %v50, %v107
    %v169 = vmul.f32 %v50, %v111
    %v170 = vmul.f32 %v50, %v115
    %v171 = vmul.f32 %v50, %v119
    %v172 = vmul.f32 %v50, %v123
    %v173 = vmul.f32 %v50, %v127
    %v174 = vmul.f32 %v50, %v131
    %v175 = vmul.f32 %v50, %v135
    %v176 = vmul.f32 %v55, %v107
    %v177 = vmul.f32 %v55, %v111
    %v178 = vmul.f32 %v55, %v115
    %v179 = vmul.f32 %v55, %v119
    %v180 = vmul.f32 %v55, %v123
    %v181 = vmul.f32 %v55, %v127
    %v182 = vmul.f32 %v55, %v131
    %v183 = vmul.f32 %v55, %v135
    %v184 = vmul.f32 %v60, %v107
    %v185 = vmul.f32 %v60, %v111
    %v186 = vmul.f32 %v60, %v115
    %v187 = vmul.f32 %v60, %v119
    %v188 = vmul.f32 %v60, %v123
    %v189 = vmul.f32 %v60, %v127
    %v190 = vmul.f32 %v60, %v131
    %v191 = vmul.f32 %v60, %v135
    %192 = vset.pattern.permute.xlu0 1
    %193 = vperm.xlu0 %192, %v20
    %v194 = vpop.permute.xlu0 %193
    %196 = vset.pattern.permute.xlu0 1
    %197 = vperm.xlu0 %196, %v21
    %v198 = vpop.permute.xlu0 %197
    %200 = vset.pattern.permute.xlu0 1
    %201 = vperm.xlu0 %200, %v22
    %v202 = vpop.permute.xlu0 %201
    %204 = vset.pattern.permute.xlu0 1
    %205 = vperm.xlu0 %204, %v23
    %v206 = vpop.permute.xlu0 %205
    %208 = vset.pattern.permute.xlu0 1
    %209 = vperm.xlu0 %208, %v24
    %v210 = vpop.permute.xlu0 %209
    %212 = vset.pattern.permute.xlu0 1
    %213 = vperm.xlu0 %212, %v25
    %v214 = vpop.permute.xlu0 %213
    %216 = vset.pattern.permute.xlu0 1
    %217 = vperm.xlu0 %216, %v26
    %v218 = vpop.permute.xlu0 %217
    %v220 = vlaneseq
    %v221 = vshrl.u32 %v220, 7
    %v222 = vsub.s32 1, %v221
    %v223 = vrot.slane %v18, %v222
    %v224 = vlaneseq
    %v225 = vshrl.u32 %v224, 7
    %v226 = vsub.s32 3, %v225
    %v227 = vrot.slane %v18, %v226
    %v228 = vlaneseq
    %v229 = vshrl.u32 %v228, 7
    %v230 = vsub.s32 5, %v229
    %v231 = vrot.slane %v18, %v230
    %v232 = vlaneseq
    %v233 = vshrl.u32 %v232, 7
    %v234 = vsub.s32 7, %v233
    %v235 = vrot.slane %v18, %v234
    %v236 = vlaneseq
    %v237 = vshrl.u32 %v236, 7
    %v238 = vsub.s32 1, %v237
    %v239 = vrot.slane %v19, %v238
    %v240 = vlaneseq
    %v241 = vshrl.u32 %v240, 7
    %v242 = vsub.s32 3, %v241
    %v243 = vrot.slane %v19, %v242
    %v244 = vlaneseq
    %v245 = vshrl.u32 %v244, 7
    %v246 = vsub.s32 5, %v245
    %v247 = vrot.slane %v19, %v246
    %v248 = vlaneseq
    %v249 = vshrl.u32 %v248, 7
    %v250 = vsub.s32 7, %v249
    %v251 = vrot.slane %v19, %v250
    %v260 = vlaneseq
    %v261 = vshrl.u32 %v260, 7
    %v262 = vsub.s32 1, %v261
    %v263 = vrot.slane %v223, %v262
    %v264 = vlaneseq
    %v265 = vshrl.u32 %v264, 7
    %v266 = vsub.s32 1, %v265
    %v267 = vrot.slane %v227, %v266
    %v268 = vlaneseq
    %v269 = vshrl.u32 %v268, 7
    %v270 = vsub.s32 1, %v269
    %v271 = vrot.slane %v231, %v270
    %v272 = vlaneseq
    %v273 = vshrl.u32 %v272, 7
    %v274 = vsub.s32 1, %v273
    %v275 = vrot.slane %v235, %v274
    %v276 = vlaneseq
    %v277 = vshrl.u32 %v276, 7
    %v278 = vsub.s32 1, %v277
    %v279 = vrot.slane %v239, %v278
    %v280 = vlaneseq
    %v281 = vshrl.u32 %v280, 7
    %v282 = vsub.s32 1, %v281
    %v283 = vrot.slane %v243, %v282
    %v284 = vlaneseq
    %v285 = vshrl.u32 %v284, 7
    %v286 = vsub.s32 1, %v285
    %v287 = vrot.slane %v247, %v286
    %v288 = vlaneseq
    %v289 = vshrl.u32 %v288, 7
    %v290 = vsub.s32 1, %v289
    %v291 = vrot.slane %v251, %v290
    %v292 = vmul.f32 %v194, %v263
    %v293 = vmul.f32 %v194, %v267
    %v294 = vmul.f32 %v194, %v271
    %v295 = vmul.f32 %v194, %v275
    %v296 = vmul.f32 %v194, %v279
    %v297 = vmul.f32 %v194, %v283
    %v298 = vmul.f32 %v194, %v287
    %v299 = vmul.f32 %v194, %v291
    %v300 = vmul.f32 %v198, %v263
    %v301 = vmul.f32 %v198, %v267
    %v302 = vmul.f32 %v198, %v271
    %v303 = vmul.f32 %v198, %v275
    %v304 = vmul.f32 %v198, %v279
    %v305 = vmul.f32 %v198, %v283
    %v306 = vmul.f32 %v198, %v287
    %v307 = vmul.f32 %v198, %v291
    %v308 = vmul.f32 %v202, %v263
    %v309 = vmul.f32 %v202, %v267
    %v310 = vmul.f32 %v202, %v271
    %v311 = vmul.f32 %v202, %v275
    %v312 = vmul.f32 %v202, %v279
    %v313 = vmul.f32 %v202, %v283
    %v314 = vmul.f32 %v202, %v287
    %v315 = vmul.f32 %v202, %v291
    %v316 = vmul.f32 %v206, %v263
    %v317 = vmul.f32 %v206, %v267
    %v318 = vmul.f32 %v206, %v271
    %v319 = vmul.f32 %v206, %v275
    %v320 = vmul.f32 %v206, %v279
    %v321 = vmul.f32 %v206, %v283
    %v322 = vmul.f32 %v206, %v287
    %v323 = vmul.f32 %v206, %v291
    %v324 = vmul.f32 %v210, %v263
    %v325 = vmul.f32 %v210, %v267
    %v326 = vmul.f32 %v210, %v271
    %v327 = vmul.f32 %v210, %v275
    %v328 = vmul.f32 %v210, %v279
    %v329 = vmul.f32 %v210, %v283
    %v330 = vmul.f32 %v210, %v287
    %v331 = vmul.f32 %v210, %v291
    %v332 = vmul.f32 %v214, %v263
    %v333 = vmul.f32 %v214, %v267
    %v334 = vmul.f32 %v214, %v271
    %v335 = vmul.f32 %v214, %v275
    %v336 = vmul.f32 %v214, %v279
    %v337 = vmul.f32 %v214, %v283
    %v338 = vmul.f32 %v214, %v287
    %v339 = vmul.f32 %v214, %v291
    %v340 = vmul.f32 %v218, %v263
    %v341 = vmul.f32 %v218, %v267
    %v342 = vmul.f32 %v218, %v271
    %v343 = vmul.f32 %v218, %v275
    %v344 = vmul.f32 %v218, %v279
    %v345 = vmul.f32 %v218, %v283
    %v346 = vmul.f32 %v218, %v287
    %v347 = vmul.f32 %v218, %v291
    %v348 = vadd.f32 %v136, %v292
    %v349 = vadd.f32 %v137, %v293
    %v350 = vadd.f32 %v138, %v294
    %v351 = vadd.f32 %v139, %v295
    %v352 = vadd.f32 %v140, %v296
    %v353 = vadd.f32 %v141, %v297
    %v354 = vadd.f32 %v142, %v298
    %v355 = vadd.f32 %v143, %v299
    %v356 = vadd.f32 %v144, %v300
    %v357 = vadd.f32 %v145, %v301
    %v358 = vadd.f32 %v146, %v302
    %v359 = vadd.f32 %v147, %v303
    %v360 = vadd.f32 %v148, %v304
    %v361 = vadd.f32 %v149, %v305
    %v362 = vadd.f32 %v150, %v306
    %v363 = vadd.f32 %v151, %v307
    %v364 = vadd.f32 %v152, %v308
    %v365 = vadd.f32 %v153, %v309
    %v366 = vadd.f32 %v154, %v310
    %v367 = vadd.f32 %v155, %v311
    %v368 = vadd.f32 %v156, %v312
    %v369 = vadd.f32 %v157, %v313
    %v370 = vadd.f32 %v158, %v314
    %v371 = vadd.f32 %v159, %v315
    %v372 = vadd.f32 %v160, %v316
    %v373 = vadd.f32 %v161, %v317
    %v374 = vadd.f32 %v162, %v318
    %v375 = vadd.f32 %v163, %v319
    %v376 = vadd.f32 %v164, %v320
    %v377 = vadd.f32 %v165, %v321
    %v378 = vadd.f32 %v166, %v322
    %v379 = vadd.f32 %v167, %v323
    %v380 = vadd.f32 %v168, %v324
    %v381 = vadd.f32 %v169, %v325
    %v382 = vadd.f32 %v170, %v326
    %v383 = vadd.f32 %v171, %v327
    %v384 = vadd.f32 %v172, %v328
    %v385 = vadd.f32 %v173, %v329
    %v386 = vadd.f32 %v174, %v330
    %v387 = vadd.f32 %v175, %v331
    %v388 = vadd.f32 %v176, %v332
    %v389 = vadd.f32 %v177, %v333
    %v390 = vadd.f32 %v178, %v334
    %v391 = vadd.f32 %v179, %v335
    %v392 = vadd.f32 %v180, %v336
    %v393 = vadd.f32 %v181, %v337
    %v394 = vadd.f32 %v182, %v338
    %v395 = vadd.f32 %v183, %v339
    %v396 = vadd.f32 %v184, %v340
    %v397 = vadd.f32 %v185, %v341
    %v398 = vadd.f32 %v186, %v342
    %v399 = vadd.f32 %v187, %v343
    %v400 = vadd.f32 %v188, %v344
    %v401 = vadd.f32 %v189, %v345
    %v402 = vadd.f32 %v190, %v346
    %v403 = vadd.f32 %v191, %v347
    %404 = vset.pattern.permute.xlu0 2
    %405 = vperm.xlu0 %404, %v20
    %v406 = vpop.permute.xlu0 %405
    %408 = vset.pattern.permute.xlu0 2
    %409 = vperm.xlu0 %408, %v21
    %v410 = vpop.permute.xlu0 %409
    %412 = vset.pattern.permute.xlu0 2
    %413 = vperm.xlu0 %412, %v22
    %v414 = vpop.permute.xlu0 %413
    %416 = vset.pattern.permute.xlu0 2
    %417 = vperm.xlu0 %416, %v23
    %v418 = vpop.permute.xlu0 %417
    %420 = vset.pattern.permute.xlu0 2
    %421 = vperm.xlu0 %420, %v24
    %v422 = vpop.permute.xlu0 %421
    %424 = vset.pattern.permute.xlu0 2
    %425 = vperm.xlu0 %424, %v25
    %v426 = vpop.permute.xlu0 %425
    %428 = vset.pattern.permute.xlu0 2
    %429 = vperm.xlu0 %428, %v26
    %v430 = vpop.permute.xlu0 %429
    %v432 = vadd.f32 %v348, %v406
    %v433 = vadd.f32 %v349, %v406
    %v434 = vadd.f32 %v350, %v406
    %v435 = vadd.f32 %v351, %v406
    %v436 = vadd.f32 %v352, %v406
    %v437 = vadd.f32 %v353, %v406
    %v438 = vadd.f32 %v354, %v406
    %v439 = vadd.f32 %v355, %v406
    %v440 = vadd.f32 %v356, %v410
    %v441 = vadd.f32 %v357, %v410
    %v442 = vadd.f32 %v358, %v410
    %v443 = vadd.f32 %v359, %v410
    %v444 = vadd.f32 %v360, %v410
    %v445 = vadd.f32 %v361, %v410
    %v446 = vadd.f32 %v362, %v410
    %v447 = vadd.f32 %v363, %v410
    %v448 = vadd.f32 %v364, %v414
    %v449 = vadd.f32 %v365, %v414
    %v450 = vadd.f32 %v366, %v414
    %v451 = vadd.f32 %v367, %v414
    %v452 = vadd.f32 %v368, %v414
    %v453 = vadd.f32 %v369, %v414
    %v454 = vadd.f32 %v370, %v414
    %v455 = vadd.f32 %v371, %v414
    %v456 = vadd.f32 %v372, %v418
    %v457 = vadd.f32 %v373, %v418
    %v458 = vadd.f32 %v374, %v418
    %v459 = vadd.f32 %v375, %v418
    %v460 = vadd.f32 %v376, %v418
    %v461 = vadd.f32 %v377, %v418
    %v462 = vadd.f32 %v378, %v418
    %v463 = vadd.f32 %v379, %v418
    %v464 = vadd.f32 %v380, %v422
    %v465 = vadd.f32 %v381, %v422
    %v466 = vadd.f32 %v382, %v422
    %v467 = vadd.f32 %v383, %v422
    %v468 = vadd.f32 %v384, %v422
    %v469 = vadd.f32 %v385, %v422
    %v470 = vadd.f32 %v386, %v422
    %v471 = vadd.f32 %v387, %v422
    %v472 = vadd.f32 %v388, %v426
    %v473 = vadd.f32 %v389, %v426
    %v474 = vadd.f32 %v390, %v426
    %v475 = vadd.f32 %v391, %v426
    %v476 = vadd.f32 %v392, %v426
    %v477 = vadd.f32 %v393, %v426
    %v478 = vadd.f32 %v394, %v426
    %v479 = vadd.f32 %v395, %v426
    %v480 = vadd.f32 %v396, %v430
    %v481 = vadd.f32 %v397, %v430
    %v482 = vadd.f32 %v398, %v430
    %v483 = vadd.f32 %v399, %v430
    %v484 = vadd.f32 %v400, %v430
    %v485 = vadd.f32 %v401, %v430
    %v486 = vadd.f32 %v402, %v430
    %v487 = vadd.f32 %v403, %v430
    %v488 = vtanh.pop %v432
    %v489 = vtanh.pop %v433
    %v490 = vtanh.pop %v434
    %v491 = vtanh.pop %v435
    %v492 = vtanh.pop %v436
    %v493 = vtanh.pop %v437
    %v494 = vtanh.pop %v438
    %v495 = vtanh.pop %v439
    %v496 = vtanh.pop %v440
    %v497 = vtanh.pop %v441
    %v498 = vtanh.pop %v442
    %v499 = vtanh.pop %v443
    %v500 = vtanh.pop %v444
    %v501 = vtanh.pop %v445
    %v502 = vtanh.pop %v446
    %v503 = vtanh.pop %v447
    %v504 = vtanh.pop %v448
    %v505 = vtanh.pop %v449
    %v506 = vtanh.pop %v450
    %v507 = vtanh.pop %v451
    %v508 = vtanh.pop %v452
    %v509 = vtanh.pop %v453
    %v510 = vtanh.pop %v454
    %v511 = vtanh.pop %v455
    %v512 = vtanh.pop %v456
    %v513 = vtanh.pop %v457
    %v514 = vtanh.pop %v458
    %v515 = vtanh.pop %v459
    %v516 = vtanh.pop %v460
    %v517 = vtanh.pop %v461
    %v518 = vtanh.pop %v462
    %v519 = vtanh.pop %v463
    %v520 = vtanh.pop %v464
    %v521 = vtanh.pop %v465
    %v522 = vtanh.pop %v466
    %v523 = vtanh.pop %v467
    %v524 = vtanh.pop %v468
    %v525 = vtanh.pop %v469
    %v526 = vtanh.pop %v470
    %v527 = vtanh.pop %v471
    %v528 = vtanh.pop %v472
    %v529 = vtanh.pop %v473
    %v530 = vtanh.pop %v474
    %v531 = vtanh.pop %v475
    %v532 = vtanh.pop %v476
    %v533 = vtanh.pop %v477
    %v534 = vtanh.pop %v478
    %v535 = vtanh.pop %v479
    %v536 = vtanh.pop %v480
    %v537 = vtanh.pop %v481
    %v538 = vtanh.pop %v482
    %v539 = vtanh.pop %v483
    %v540 = vtanh.pop %v484
    %v541 = vtanh.pop %v485
    %v542 = vtanh.pop %v486
    %v543 = vtanh.pop %v487
    %v544 = vld [vmem:[%s1] sm:$0xff]
    %v545 = vld [vmem:[%s1 + $0x8] sm:$0xff]
    %v546 = vld [vmem:[%s1 + $0x10] sm:$0xff]
    %v547 = vld [vmem:[%s1 + $0x18] sm:$0xff]
    %v548 = vld [vmem:[%s1 + $0x20] sm:$0xff]
    %v549 = vld [vmem:[%s1 + $0x28] sm:$0xff]
    %v550 = vld [vmem:[%s1 + $0x30] sm:$0x3]
    %551 = vset.pattern.permute.xlu0 3
    %552 = vperm.xlu0 %551, %v20
    %v553 = vpop.permute.xlu0 %552
    %555 = vset.pattern.permute.xlu0 3
    %556 = vperm.xlu0 %555, %v21
    %v557 = vpop.permute.xlu0 %556
    %559 = vset.pattern.permute.xlu0 3
    %560 = vperm.xlu0 %559, %v22
    %v561 = vpop.permute.xlu0 %560
    %563 = vset.pattern.permute.xlu0 3
    %564 = vperm.xlu0 %563, %v23
    %v565 = vpop.permute.xlu0 %564
    %567 = vset.pattern.permute.xlu0 3
    %568 = vperm.xlu0 %567, %v24
    %v569 = vpop.permute.xlu0 %568
    %571 = vset.pattern.permute.xlu0 3
    %572 = vperm.xlu0 %571, %v25
    %v573 = vpop.permute.xlu0 %572
    %575 = vset.pattern.permute.xlu0 3
    %576 = vperm.xlu0 %575, %v26
    %v577 = vpop.permute.xlu0 %576
    %vm579 = vcmask 408576
    %v581 = vsel %vm579, %v544, 0
    %v584 = vsel %vm579, %v545, 0
    %v587 = vsel %vm579, %v546, 0
    %v590 = vsel %vm579, %v547, 0
    %v593 = vsel %vm579, %v548, 0
    %v596 = vsel %vm579, %v549, 0
    %v599 = vsel %vm579, %v550, 0
    %vm601 = vcmask 1041408
    %v603 = vsel %vm601, %v536, 0
    %v606 = vsel %vm601, %v537, 0
    %v609 = vsel %vm601, %v538, 0
    %v612 = vsel %vm601, %v539, 0
    %v615 = vsel %vm601, %v540, 0
    %v618 = vsel %vm601, %v541, 0
    %v621 = vsel %vm601, %v542, 0
    %v624 = vsel %vm601, %v543, 0
    %626 = vmatprep.subr.mxu0 %v489
    %627 = vmatpush1.msra.mxu0 %v488
    %628 = vmatprep.subr.mxu0 %v497
    %629 = vmatpush1.msra.mxu0 %v496
    %630 = vmatprep.subr.mxu0 %v505
    %631 = vmatpush1.msra.mxu0 %v504
    %632 = vmatprep.subr.mxu0 %v513
    %633 = vmatpush1.msra.mxu0 %v512
    %634 = vmatprep.subr.mxu0 %v521
    %635 = vmatpush1.msra.mxu0 %v520
    %636 = vmatprep.subr.mxu0 %v529
    %637 = vmatpush1.msra.mxu0 %v528
    %638 = vmatprep.subr.mxu0 %v606
    %639 = vmatpush1.msra.mxu0 %v603
    %640 = vmatprep.subr.mxu0 0.0
    %641 = vmatpush1.msra.mxu0 0.0
    %642 = vmatprep.subr.mxu0 0.0
    %643 = vmatpush1.msra.mxu0 0.0
    %644 = vmatprep.subr.mxu0 0.0
    %645 = vmatpush1.msra.mxu0 0.0
    %646 = vmatprep.subr.mxu0 0.0
    %647 = vmatpush1.msra.mxu0 0.0
    %648 = vmatprep.subr.mxu0 0.0
    %649 = vmatpush1.msra.mxu0 0.0
    %650 = vmatprep.subr.mxu0 0.0
    %651 = vmatpush1.msra.mxu0 0.0
    %652 = vmatprep.subr.mxu0 0.0
    %653 = vmatpush1.msra.mxu0 0.0
    %654 = vmatprep.subr.mxu0 0.0
    %655 = vmatpush1.msra.mxu0 0.0
    %656 = vmatprep.subr.mxu0 0.0
    %657 = vmatpush1.msra.mxu0 0.0
    %658 = vmatprep.subr.mxu0 0.0
    %659 = vmatpush1.msra.mxu0 0.0
    %660 = vmatprep.subr.mxu0 0.0
    %661 = vmatpush1.msra.mxu0 0.0
    %662 = vmatprep.subr.mxu0 0.0
    %663 = vmatpush1.msra.mxu0 0.0
    %664 = vmatprep.subr.mxu0 0.0
    %665 = vmatpush1.msra.mxu0 0.0
    %666 = vmatprep.subr.mxu0 0.0
    %667 = vmatpush1.msra.mxu0 0.0
    %668 = vmatprep.subr.mxu0 0.0
    %669 = vmatpush1.msra.mxu0 0.0
    %670 = vmatprep.subr.mxu0 0.0
    %671 = vmatpush1.msra.mxu0 0.0
    %672 = vmatprep.subr.mxu0 0.0
    %673 = vmatpush1.msra.mxu0 0.0
    %674 = vmatprep.subr.mxu0 0.0
    %675 = vmatpush1.msra.mxu0 0.0
    %676 = vmatprep.subr.mxu0 0.0
    %677 = vmatpush1.msra.mxu0 0.0
    %678 = vmatprep.subr.mxu0 0.0
    %679 = vmatpush1.msra.mxu0 0.0
    %680 = vmatprep.subr.mxu0 0.0
    %681 = vmatpush1.msra.mxu0 0.0
    %682 = vmatprep.subr.mxu0 0.0
    %683 = vmatpush1.msra.mxu0 0.0
    %684 = vmatprep.subr.mxu0 0.0
    %685 = vmatpush1.msra.mxu0 0.0
    %686 = vmatprep.subr.mxu0 0.0
    %687 = vmatpush1.msra.mxu0 0.0
    %688 = vmatprep.subr.mxu0 0.0
    %689 = vmatpush1.msra.mxu0 0.0
    %690 = vmatprep.mubr.f32.mxu0 0.0
    %691 = vmatmul.mubr.f32.gmra.mrb[0].mxu0 %v581
    %v692 = vpop.f32.mrb[0].mxu0
    %v693 = vadd.f32 %v553, %v692
    %v694 = vpop.f32.mrb[0].mxu0
    %v695 = vadd.f32 %v553, %v694
    %696 = vmatprep.mubr.f32.mxu0 0.0
    %697 = vmatmul.mubr.f32.gmra.mrb[0].mxu0 %v584
    %v698 = vpop.f32.mrb[0].mxu0
    %v699 = vadd.f32 %v557, %v698
    %v700 = vpop.f32.mrb[0].mxu0
    %v701 = vadd.f32 %v557, %v700
    %702 = vmatprep.mubr.f32.mxu0 0.0
    %703 = vmatmul.mubr.f32.gmra.mrb[0].mxu0 %v587
    %v704 = vpop.f32.mrb[0].mxu0
    %v705 = vadd.f32 %v561, %v704
    %v706 = vpop.f32.mrb[0].mxu0
    %v707 = vadd.f32 %v561, %v706
    %708 = vmatprep.mubr.f32.mxu0 0.0
    %709 = vmatmul.mubr.f32.gmra.mrb[0].mxu0 %v590
    %v710 = vpop.f32.mrb[0].mxu0
    %v711 = vadd.f32 %v565, %v710
    %v712 = vpop.f32.mrb[0].mxu0
    %v713 = vadd.f32 %v565, %v712
    %714 = vmatprep.mubr.f32.mxu0 0.0
    %715 = vmatmul.mubr.f32.gmra.mrb[0].mxu0 %v593
    %v716 = vpop.f32.mrb[0].mxu0
    %v717 = vadd.f32 %v569, %v716
    %v718 = vpop.f32.mrb[0].mxu0
    %v719 = vadd.f32 %v569, %v718
    %720 = vmatprep.mubr.f32.mxu0 0.0
    %721 = vmatmul.mubr.f32.gmra.mrb[0].mxu0 %v596
    %v722 = vpop.f32.mrb[0].mxu0
    %v723 = vadd.f32 %v573, %v722
    %v724 = vpop.f32.mrb[0].mxu0
    %v725 = vadd.f32 %v573, %v724
    %726 = vmatprep.mubr.f32.mxu0 0.0
    %727 = vmatmul.mubr.f32.gmra.mrb[0].mxu0 %v599
    %v728 = vpop.f32.mrb[0].mxu0
    %v729 = vadd.f32 %v577, %v728
    %v730 = vpop.f32.mrb[0].mxu0
    %v731 = vadd.f32 %v577, %v730
    %732 = vdwg.mxu0
    %733 = vmatprep.subr.mxu0 %v491
    %734 = vmatpush1.msra.mxu0 %v490
    %735 = vmatprep.subr.mxu0 %v499
    %736 = vmatpush1.msra.mxu0 %v498
    %737 = vmatprep.subr.mxu0 %v507
    %738 = vmatpush1.msra.mxu0 %v506
    %739 = vmatprep.subr.mxu0 %v515
    %740 = vmatpush1.msra.mxu0 %v514
    %741 = vmatprep.subr.mxu0 %v523
    %742 = vmatpush1.msra.mxu0 %v522
    %743 = vmatprep.subr.mxu0 %v531
    %744 = vmatpush1.msra.mxu0 %v530
    %745 = vmatprep.subr.mxu0 %v612
    %746 = vmatpush1.msra.mxu0 %v609
    %747 = vmatprep.subr.mxu0 0.0
    %748 = vmatpush1.msra.mxu0 0.0
    %749 = vmatprep.subr.mxu0 0.0
    %750 = vmatpush1.msra.mxu0 0.0
    %751 = vmatprep.subr.mxu0 0.0
    %752 = vmatpush1.msra.mxu0 0.0
    %753 = vmatprep.subr.mxu0 0.0
    %754 = vmatpush1.msra.mxu0 0.0
    %755 = vmatprep.subr.mxu0 0.0
    %756 = vmatpush1.msra.mxu0 0.0
    %757 = vmatprep.subr.mxu0 0.0
    %758 = vmatpush1.msra.mxu0 0.0
    %759 = vmatprep.subr.mxu0 0.0
    %760 = vmatpush1.msra.mxu0 0.0
    %761 = vmatprep.subr.mxu0 0.0
    %762 = vmatpush1.msra.mxu0 0.0
    %763 = vmatprep.subr.mxu0 0.0
    %764 = vmatpush1.msra.mxu0 0.0
    %765 = vmatprep.subr.mxu0 0.0
    %766 = vmatpush1.msra.mxu0 0.0
    %767 = vmatprep.subr.mxu0 0.0
    %768 = vmatpush1.msra.mxu0 0.0
    %769 = vmatprep.subr.mxu0 0.0
    %770 = vmatpush1.msra.mxu0 0.0
    %771 = vmatprep.subr.mxu0 0.0
    %772 = vmatpush1.msra.mxu0 0.0
    %773 = vmatprep.subr.mxu0 0.0
    %774 = vmatpush1.msra.mxu0 0.0
    %775 = vmatprep.subr.mxu0 0.0
    %776 = vmatpush1.msra.mxu0 0.0
    %777 = vmatprep.subr.mxu0 0.0
    %778 = vmatpush1.msra.mxu0 0.0
    %779 = vmatprep.subr.mxu0 0.0
    %780 = vmatpush1.msra.mxu0 0.0
    %781 = vmatprep.subr.mxu0 0.0
    %782 = vmatpush1.msra.mxu0 0.0
    %783 = vmatprep.subr.mxu0 0.0
    %784 = vmatpush1.msra.mxu0 0.0
    %785 = vmatprep.subr.mxu0 0.0
    %786 = vmatpush1.msra.mxu0 0.0
    %787 = vmatprep.subr.mxu0 0.0
    %788 = vmatpush1.msra.mxu0 0.0
    %789 = vmatprep.subr.mxu0 0.0
    %790 = vmatpush1.msra.mxu0 0.0
    %791 = vmatprep.subr.mxu0 0.0
    %792 = vmatpush1.msra.mxu0 0.0
    %793 = vmatprep.subr.mxu0 0.0
    %794 = vmatpush1.msra.mxu0 0.0
    %795 = vmatprep.subr.mxu0 0.0
    %796 = vmatpush1.msra.mxu0 0.0
    %797 = vmatprep.mubr.f32.mxu0 0.0
    %798 = vmatmul.mubr.f32.gmra.mrb[0].mxu0 %v581
    %v799 = vpop.f32.mrb[0].mxu0
    %v800 = vadd.f32 %v553, %v799
    %v801 = vpop.f32.mrb[0].mxu0
    %v802 = vadd.f32 %v553, %v801
    %803 = vmatprep.mubr.f32.mxu0 0.0
    %804 = vmatmul.mubr.f32.gmra.mrb[0].mxu0 %v584
    %v805 = vpop.f32.mrb[0].mxu0
    %v806 = vadd.f32 %v557, %v805
    %v807 = vpop.f32.mrb[0].mxu0
    %v808 = vadd.f32 %v557, %v807
    %809 = vmatprep.mubr.f32.mxu0 0.0
    %810 = vmatmul.mubr.f32.gmra.mrb[0].mxu0 %v587
    %v811 = vpop.f32.mrb[0].mxu0
    %v812 = vadd.f32 %v561, %v811
    %v813 = vpop.f32.mrb[0].mxu0
    %v814 = vadd.f32 %v561, %v813
    %815 = vmatprep.mubr.f32.mxu0 0.0
    %816 = vmatmul.mubr.f32.gmra.mrb[0].mxu0 %v590
    %v817 = vpop.f32.mrb[0].mxu0
    %v818 = vadd.f32 %v565, %v817
    %v819 = vpop.f32.mrb[0].mxu0
    %v820 = vadd.f32 %v565, %v819
    %821 = vmatprep.mubr.f32.mxu0 0.0
    %822 = vmatmul.mubr.f32.gmra.mrb[0].mxu0 %v593
    %v823 = vpop.f32.mrb[0].mxu0
    %v824 = vadd.f32 %v569, %v823
    %v825 = vpop.f32.mrb[0].mxu0
    %v826 = vadd.f32 %v569, %v825
    %827 = vmatprep.mubr.f32.mxu0 0.0
    %828 = vmatmul.mubr.f32.gmra.mrb[0].mxu0 %v596
    %v829 = vpop.f32.mrb[0].mxu0
    %v830 = vadd.f32 %v573, %v829
    %v831 = vpop.f32.mrb[0].mxu0
    %v832 = vadd.f32 %v573, %v831
    %833 = vmatprep.mubr.f32.mxu0 0.0
    %834 = vmatmul.mubr.f32.gmra.mrb[0].mxu0 %v599
    %v835 = vpop.f32.mrb[0].mxu0
    %v836 = vadd.f32 %v577, %v835
    %v837 = vpop.f32.mrb[0].mxu0
    %v838 = vadd.f32 %v577, %v837
    %839 = vdwg.mxu0
    %840 = vmatprep.subr.mxu0 %v493
    %841 = vmatpush1.msra.mxu0 %v492
    %842 = vmatprep.subr.mxu0 %v501
    %843 = vmatpush1.msra.mxu0 %v500
    %844 = vmatprep.subr.mxu0 %v509
    %845 = vmatpush1.msra.mxu0 %v508
    %846 = vmatprep.subr.mxu0 %v517
    %847 = vmatpush1.msra.mxu0 %v516
    %848 = vmatprep.subr.mxu0 %v525
    %849 = vmatpush1.msra.mxu0 %v524
    %850 = vmatprep.subr.mxu0 %v533
    %851 = vmatpush1.msra.mxu0 %v532
    %852 = vmatprep.subr.mxu0 %v618
    %853 = vmatpush1.msra.mxu0 %v615
    %854 = vmatprep.subr.mxu0 0.0
    %855 = vmatpush1.msra.mxu0 0.0
    %856 = vmatprep.subr.mxu0 0.0
    %857 = vmatpush1.msra.mxu0 0.0
    %858 = vmatprep.subr.mxu0 0.0
    %859 = vmatpush1.msra.mxu0 0.0
    %860 = vmatprep.subr.mxu0 0.0
    %861 = vmatpush1.msra.mxu0 0.0
    %862 = vmatprep.subr.mxu0 0.0
    %863 = vmatpush1.msra.mxu0 0.0
    %864 = vmatprep.subr.mxu0 0.0
    %865 = vmatpush1.msra.mxu0 0.0
    %866 = vmatprep.subr.mxu0 0.0
    %867 = vmatpush1.msra.mxu0 0.0
    %868 = vmatprep.subr.mxu0 0.0
    %869 = vmatpush1.msra.mxu0 0.0
    %870 = vmatprep.subr.mxu0 0.0
    %871 = vmatpush1.msra.mxu0 0.0
    %872 = vmatprep.subr.mxu0 0.0
    %873 = vmatpush1.msra.mxu0 0.0
    %874 = vmatprep.subr.mxu0 0.0
    %875 = vmatpush1.msra.mxu0 0.0
    %876 = vmatprep.subr.mxu0 0.0
    %877 = vmatpush1.msra.mxu0 0.0
    %878 = vmatprep.subr.mxu0 0.0
    %879 = vmatpush1.msra.mxu0 0.0
    %880 = vmatprep.subr.mxu0 0.0
    %881 = vmatpush1.msra.mxu0 0.0
    %882 = vmatprep.subr.mxu0 0.0
    %883 = vmatpush1.msra.mxu0 0.0
    %884 = vmatprep.subr.mxu0 0.0
    %885 = vmatpush1.msra.mxu0 0.0
    %886 = vmatprep.subr.mxu0 0.0
    %887 = vmatpush1.msra.mxu0 0.0
    %888 = vmatprep.subr.mxu0 0.0
    %889 = vmatpush1.msra.mxu0 0.0
    %890 = vmatprep.subr.mxu0 0.0
    %891 = vmatpush1.msra.mxu0 0.0
    %892 = vmatprep.subr.mxu0 0.0
    %893 = vmatpush1.msra.mxu0 0.0
    %894 = vmatprep.subr.mxu0 0.0
    %895 = vmatpush1.msra.mxu0 0.0
    %896 = vmatprep.subr.mxu0 0.0
    %897 = vmatpush1.msra.mxu0 0.0
    %898 = vmatprep.subr.mxu0 0.0
    %899 = vmatpush1.msra.mxu0 0.0
    %900 = vmatprep.subr.mxu0 0.0
    %901 = vmatpush1.msra.mxu0 0.0
    %902 = vmatprep.subr.mxu0 0.0
    %903 = vmatpush1.msra.mxu0 0.0
    %904 = vmatprep.mubr.f32.mxu0 0.0
    %905 = vmatmul.mubr.f32.gmra.mrb[0].mxu0 %v581
    %v906 = vpop.f32.mrb[0].mxu0
    %v907 = vadd.f32 %v553, %v906
    %v908 = vpop.f32.mrb[0].mxu0
    %v909 = vadd.f32 %v553, %v908
    %910 = vmatprep.mubr.f32.mxu0 0.0
    %911 = vmatmul.mubr.f32.gmra.mrb[0].mxu0 %v584
    %v912 = vpop.f32.mrb[0].mxu0
    %v913 = vadd.f32 %v557, %v912
    %v914 = vpop.f32.mrb[0].mxu0
    %v915 = vadd.f32 %v557, %v914
    %916 = vmatprep.mubr.f32.mxu0 0.0
    %917 = vmatmul.mubr.f32.gmra.mrb[0].mxu0 %v587
    %v918 = vpop.f32.mrb[0].mxu0
    %v919 = vadd.f32 %v561, %v918
    %v920 = vpop.f32.mrb[0].mxu0
    %v921 = vadd.f32 %v561, %v920
    %922 = vmatprep.mubr.f32.mxu0 0.0
    %923 = vmatmul.mubr.f32.gmra.mrb[0].mxu0 %v590
    %v924 = vpop.f32.mrb[0].mxu0
    %v925 = vadd.f32 %v565, %v924
    %v926 = vpop.f32.mrb[0].mxu0
    %v927 = vadd.f32 %v565, %v926
    %928 = vmatprep.mubr.f32.mxu0 0.0
    %929 = vmatmul.mubr.f32.gmra.mrb[0].mxu0 %v593
    %v930 = vpop.f32.mrb[0].mxu0
    %v931 = vadd.f32 %v569, %v930
    %v932 = vpop.f32.mrb[0].mxu0
    %v933 = vadd.f32 %v569, %v932
    %934 = vmatprep.mubr.f32.mxu0 0.0
    %935 = vmatmul.mubr.f32.gmra.mrb[0].mxu0 %v596
    %v936 = vpop.f32.mrb[0].mxu0
    %v937 = vadd.f32 %v573, %v936
    %v938 = vpop.f32.mrb[0].mxu0
    %v939 = vadd.f32 %v573, %v938
    %940 = vmatprep.mubr.f32.mxu0 0.0
    %941 = vmatmul.mubr.f32.gmra.mrb[0].mxu0 %v599
    %v942 = vpop.f32.mrb[0].mxu0
    %v943 = vadd.f32 %v577, %v942
    %v944 = vpop.f32.mrb[0].mxu0
    %v945 = vadd.f32 %v577, %v944
    %946 = vdwg.mxu0
    %947 = vmatprep.subr.mxu0 %v495
    %948 = vmatpush1.msra.mxu0 %v494
    %949 = vmatprep.subr.mxu0 %v503
    %950 = vmatpush1.msra.mxu0 %v502
    %951 = vmatprep.subr.mxu0 %v511
    %952 = vmatpush1.msra.mxu0 %v510
    %953 = vmatprep.subr.mxu0 %v519
    %954 = vmatpush1.msra.mxu0 %v518
    %955 = vmatprep.subr.mxu0 %v527
    %956 = vmatpush1.msra.mxu0 %v526
    %957 = vmatprep.subr.mxu0 %v535
    %958 = vmatpush1.msra.mxu0 %v534
    %959 = vmatprep.subr.mxu0 %v624
    %960 = vmatpush1.msra.mxu0 %v621
    %961 = vmatprep.subr.mxu0 0.0
    %962 = vmatpush1.msra.mxu0 0.0
    %963 = vmatprep.subr.mxu0 0.0
    %964 = vmatpush1.msra.mxu0 0.0
    %965 = vmatprep.subr.mxu0 0.0
    %966 = vmatpush1.msra.mxu0 0.0
    %967 = vmatprep.subr.mxu0 0.0
    %968 = vmatpush1.msra.mxu0 0.0
    %969 = vmatprep.subr.mxu0 0.0
    %970 = vmatpush1.msra.mxu0 0.0
    %971 = vmatprep.subr.mxu0 0.0
    %972 = vmatpush1.msra.mxu0 0.0
    %973 = vmatprep.subr.mxu0 0.0
    %974 = vmatpush1.msra.mxu0 0.0
    %975 = vmatprep.subr.mxu0 0.0
    %976 = vmatpush1.msra.mxu0 0.0
    %977 = vmatprep.subr.mxu0 0.0
    %978 = vmatpush1.msra.mxu0 0.0
    %979 = vmatprep.subr.mxu0 0.0
    %980 = vmatpush1.msra.mxu0 0.0
    %981 = vmatprep.subr.mxu0 0.0
    %982 = vmatpush1.msra.mxu0 0.0
    %983 = vmatprep.subr.mxu0 0.0
    %984 = vmatpush1.msra.mxu0 0.0
    %985 = vmatprep.subr.mxu0 0.0
    %986 = vmatpush1.msra.mxu0 0.0
    %987 = vmatprep.subr.mxu0 0.0
    %988 = vmatpush1.msra.mxu0 0.0
    %989 = vmatprep.subr.mxu0 0.0
    %990 = vmatpush1.msra.mxu0 0.0
    %991 = vmatprep.subr.mxu0 0.0
    %992 = vmatpush1.msra.mxu0 0.0
    %993 = vmatprep.subr.mxu0 0.0
    %994 = vmatpush1.msra.mxu0 0.0
    %995 = vmatprep.subr.mxu0 0.0
    %996 = vmatpush1.msra.mxu0 0.0
    %997 = vmatprep.subr.mxu0 0.0
    %998 = vmatpush1.msra.mxu0 0.0
    %999 = vmatprep.subr.mxu0 0.0
    %1000 = vmatpush1.msra.mxu0 0.0
    %1001 = vmatprep.subr.mxu0 0.0
    %1002 = vmatpush1.msra.mxu0 0.0
    %1003 = vmatprep.subr.mxu0 0.0
    %1004 = vmatpush1.msra.mxu0 0.0
    %1005 = vmatprep.subr.mxu0 0.0
    %1006 = vmatpush1.msra.mxu0 0.0
    %1007 = vmatprep.subr.mxu0 0.0
    %1008 = vmatpush1.msra.mxu0 0.0
    %1009 = vmatprep.subr.mxu0 0.0
    %1010 = vmatpush1.msra.mxu0 0.0
    %1011 = vmatprep.mubr.f32.mxu0 0.0
    %1012 = vmatmul.mubr.f32.gmra.mrb[0].mxu0 %v581
    %v1013 = vpop.f32.mrb[0].mxu0
    %v1014 = vadd.f32 %v553, %v1013
    %v1015 = vpop.f32.mrb[0].mxu0
    %v1016 = vadd.f32 %v553, %v1015
    %1017 = vmatprep.mubr.f32.mxu0 0.0
    %1018 = vmatmul.mubr.f32.gmra.mrb[0].mxu0 %v584
    %v1019 = vpop.f32.mrb[0].mxu0
    %v1020 = vadd.f32 %v557, %v1019
    %v1021 = vpop.f32.mrb[0].mxu0
    %v1022 = vadd.f32 %v557, %v1021
    %1023 = vmatprep.mubr.f32.mxu0 0.0
    %1024 = vmatmul.mubr.f32.gmra.mrb[0].mxu0 %v587
    %v1025 = vpop.f32.mrb[0].mxu0
    %v1026 = vadd.f32 %v561, %v1025
    %v1027 = vpop.f32.mrb[0].mxu0
    %v1028 = vadd.f32 %v561, %v1027
    %1029 = vmatprep.mubr.f32.mxu0 0.0
    %1030 = vmatmul.mubr.f32.gmra.mrb[0].mxu0 %v590
    %v1031 = vpop.f32.mrb[0].mxu0
    %v1032 = vadd.f32 %v565, %v1031
    %v1033 = vpop.f32.mrb[0].mxu0
    %v1034 = vadd.f32 %v565, %v1033
    %1035 = vmatprep.mubr.f32.mxu0 0.0
    %1036 = vmatmul.mubr.f32.gmra.mrb[0].mxu0 %v593
    %v1037 = vpop.f32.mrb[0].mxu0
    %v1038 = vadd.f32 %v569, %v1037
    %v1039 = vpop.f32.mrb[0].mxu0
    %v1040 = vadd.f32 %v569, %v1039
    %1041 = vmatprep.mubr.f32.mxu0 0.0
    %1042 = vmatmul.mubr.f32.gmra.mrb[0].mxu0 %v596
    %v1043 = vpop.f32.mrb[0].mxu0
    %v1044 = vadd.f32 %v573, %v1043
    %v1045 = vpop.f32.mrb[0].mxu0
    %v1046 = vadd.f32 %v573, %v1045
    %1047 = vmatprep.mubr.f32.mxu0 0.0
    %1048 = vmatmul.mubr.f32.gmra.mrb[0].mxu0 %v599
    %v1049 = vpop.f32.mrb[0].mxu0
    %v1050 = vadd.f32 %v577, %v1049
    %v1051 = vpop.f32.mrb[0].mxu0
    %v1052 = vadd.f32 %v577, %v1051
    %1053 = vdwg.mxu0
    %v1054 = vtanh.pop %v693
    %v1055 = vtanh.pop %v695
    %v1056 = vtanh.pop %v800
    %v1057 = vtanh.pop %v802
    %v1058 = vtanh.pop %v907
    %v1059 = vtanh.pop %v909
    %v1060 = vtanh.pop %v1014
    %v1061 = vtanh.pop %v1016
    %v1062 = vtanh.pop %v699
    %v1063 = vtanh.pop %v701
    %v1064 = vtanh.pop %v806
    %v1065 = vtanh.pop %v808
    %v1066 = vtanh.pop %v913
    %v1067 = vtanh.pop %v915
    %v1068 = vtanh.pop %v1020
    %v1069 = vtanh.pop %v1022
    %v1070 = vtanh.pop %v705
    %v1071 = vtanh.pop %v707
    %v1072 = vtanh.pop %v812
    %v1073 = vtanh.pop %v814
    %v1074 = vtanh.pop %v919
    %v1075 = vtanh.pop %v921
    %v1076 = vtanh.pop %v1026
    %v1077 = vtanh.pop %v1028
    %v1078 = vtanh.pop %v711
    %v1079 = vtanh.pop %v713
    %v1080 = vtanh.pop %v818
    %v1081 = vtanh.pop %v820
    %v1082 = vtanh.pop %v925
    %v1083 = vtanh.pop %v927
    %v1084 = vtanh.pop %v1032
    %v1085 = vtanh.pop %v1034
    %v1086 = vtanh.pop %v717
    %v1087 = vtanh.pop %v719
    %v1088 = vtanh.pop %v824
    %v1089 = vtanh.pop %v826
    %v1090 = vtanh.pop %v931
    %v1091 = vtanh.pop %v933
    %v1092 = vtanh.pop %v1038
    %v1093 = vtanh.pop %v1040
    %v1094 = vtanh.pop %v723
    %v1095 = vtanh.pop %v725
    %v1096 = vtanh.pop %v830
    %v1097 = vtanh.pop %v832
    %v1098 = vtanh.pop %v937
    %v1099 = vtanh.pop %v939
    %v1100 = vtanh.pop %v1044
    %v1101 = vtanh.pop %v1046
    %v1102 = vtanh.pop %v729
    %v1103 = vtanh.pop %v731
    %v1104 = vtanh.pop %v836
    %v1105 = vtanh.pop %v838
    %v1106 = vtanh.pop %v943
    %v1107 = vtanh.pop %v945
    %v1108 = vtanh.pop %v1050
    %v1109 = vtanh.pop %v1052
    %s1110 = scalar_lea.vmem %s1, 56
    %v1111 = vld [vmem:[%s1110] sm:$0xff]
    %v1112 = vld [vmem:[%s1110 + $0x8] sm:$0xff]
    %v1113 = vld [vmem:[%s1110 + $0x10] sm:$0xff]
    %v1114 = vld [vmem:[%s1110 + $0x18] sm:$0xff]
    %v1115 = vld [vmem:[%s1110 + $0x20] sm:$0xff]
    %v1116 = vld [vmem:[%s1110 + $0x28] sm:$0xff]
    %v1117 = vld [vmem:[%s1110 + $0x30] sm:$0x3]
    %1118 = vset.pattern.permute.xlu0 4
    %1119 = vperm.xlu0 %1118, %v20
    %v1120 = vpop.permute.xlu0 %1119
    %1122 = vset.pattern.permute.xlu0 4
    %1123 = vperm.xlu0 %1122, %v21
    %v1124 = vpop.permute.xlu0 %1123
    %1126 = vset.pattern.permute.xlu0 4
    %1127 = vperm.xlu0 %1126, %v22
    %v1128 = vpop.permute.xlu0 %1127
    %1130 = vset.pattern.permute.xlu0 4
    %1131 = vperm.xlu0 %1130, %v23
    %v1132 = vpop.permute.xlu0 %1131
    %1134 = vset.pattern.permute.xlu0 4
    %1135 = vperm.xlu0 %1134, %v24
    %v1136 = vpop.permute.xlu0 %1135
    %1138 = vset.pattern.permute.xlu0 4
    %1139 = vperm.xlu0 %1138, %v25
    %v1140 = vpop.permute.xlu0 %1139
    %1142 = vset.pattern.permute.xlu0 4
    %1143 = vperm.xlu0 %1142, %v26
    %v1144 = vpop.permute.xlu0 %1143
    %v1147 = vsel %vm579, %v1111, 0
    %v1150 = vsel %vm579, %v1112, 0
    %v1153 = vsel %vm579, %v1113, 0
    %v1156 = vsel %vm579, %v1114, 0
    %v1159 = vsel %vm579, %v1115, 0
    %v1162 = vsel %vm579, %v1116, 0
    %v1165 = vsel %vm579, %v1117, 0
    %v1168 = vsel %vm601, %v1102, 0
    %v1171 = vsel %vm601, %v1103, 0
    %v1174 = vsel %vm601, %v1104, 0
    %v1177 = vsel %vm601, %v1105, 0
    %v1180 = vsel %vm601, %v1106, 0
    %v1183 = vsel %vm601, %v1107, 0
    %v1186 = vsel %vm601, %v1108, 0
    %v1189 = vsel %vm601, %v1109, 0
    %1191 = vmatprep.subr.mxu0 %v1055
    %1192 = vmatpush1.msra.mxu0 %v1054
    %1193 = vmatprep.subr.mxu0 %v1063
    %1194 = vmatpush1.msra.mxu0 %v1062
    %1195 = vmatprep.subr.mxu0 %v1071
    %1196 = vmatpush1.msra.mxu0 %v1070
    %1197 = vmatprep.subr.mxu0 %v1079
    %1198 = vmatpush1.msra.mxu0 %v1078
    %1199 = vmatprep.subr.mxu0 %v1087
    %1200 = vmatpush1.msra.mxu0 %v1086
    %1201 = vmatprep.subr.mxu0 %v1095
    %1202 = vmatpush1.msra.mxu0 %v1094
    %1203 = vmatprep.subr.mxu0 %v1171
    %1204 = vmatpush1.msra.mxu0 %v1168
    %1205 = vmatprep.subr.mxu0 0.0
    %1206 = vmatpush1.msra.mxu0 0.0
    %1207 = vmatprep.subr.mxu0 0.0
    %1208 = vmatpush1.msra.mxu0 0.0
    %1209 = vmatprep.subr.mxu0 0.0
    %1210 = vmatpush1.msra.mxu0 0.0
    %1211 = vmatprep.subr.mxu0 0.0
    %1212 = vmatpush1.msra.mxu0 0.0
    %1213 = vmatprep.subr.mxu0 0.0
    %1214 = vmatpush1.msra.mxu0 0.0
    %1215 = vmatprep.subr.mxu0 0.0
    %1216 = vmatpush1.msra.mxu0 0.0
    %1217 = vmatprep.subr.mxu0 0.0
    %1218 = vmatpush1.msra.mxu0 0.0
    %1219 = vmatprep.subr.mxu0 0.0
    %1220 = vmatpush1.msra.mxu0 0.0
    %1221 = vmatprep.subr.mxu0 0.0
    %1222 = vmatpush1.msra.mxu0 0.0
    %1223 = vmatprep.subr.mxu0 0.0
    %1224 = vmatpush1.msra.mxu0 0.0
    %1225 = vmatprep.subr.mxu0 0.0
    %1226 = vmatpush1.msra.mxu0 0.0
    %1227 = vmatprep.subr.mxu0 0.0
    %1228 = vmatpush1.msra.mxu0 0.0
    %1229 = vmatprep.subr.mxu0 0.0
    %1230 = vmatpush1.msra.mxu0 0.0
    %1231 = vmatprep.subr.mxu0 0.0
    %1232 = vmatpush1.msra.mxu0 0.0
    %1233 = vmatprep.subr.mxu0 0.0
    %1234 = vmatpush1.msra.mxu0 0.0
    %1235 = vmatprep.subr.mxu0 0.0
    %1236 = vmatpush1.msra.mxu0 0.0
    %1237 = vmatprep.subr.mxu0 0.0
    %1238 = vmatpush1.msra.mxu0 0.0
    %1239 = vmatprep.subr.mxu0 0.0
    %1240 = vmatpush1.msra.mxu0 0.0
    %1241 = vmatprep.subr.mxu0 0.0
    %1242 = vmatpush1.msra.mxu0 0.0
    %1243 = vmatprep.subr.mxu0 0.0
    %1244 = vmatpush1.msra.mxu0 0.0
    %1245 = vmatprep.subr.mxu0 0.0
    %1246 = vmatpush1.msra.mxu0 0.0
    %1247 = vmatprep.subr.mxu0 0.0
    %1248 = vmatpush1.msra.mxu0 0.0
    %1249 = vmatprep.subr.mxu0 0.0
    %1250 = vmatpush1.msra.mxu0 0.0
    %1251 = vmatprep.subr.mxu0 0.0
    %1252 = vmatpush1.msra.mxu0 0.0
    %1253 = vmatprep.subr.mxu0 0.0
    %1254 = vmatpush1.msra.mxu0 0.0
    %1255 = vmatprep.mubr.f32.mxu0 0.0
    %1256 = vmatmul.mubr.f32.gmra.mrb[0].mxu0 %v1147
    %v1257 = vpop.f32.mrb[0].mxu0
    %v1258 = vadd.f32 %v1120, %v1257
    %v1259 = vpop.f32.mrb[0].mxu0
    %v1260 = vadd.f32 %v1120, %v1259
    %1261 = vmatprep.mubr.f32.mxu0 0.0
    %1262 = vmatmul.mubr.f32.gmra.mrb[0].mxu0 %v1150
    %v1263 = vpop.f32.mrb[0].mxu0
    %v1264 = vadd.f32 %v1124, %v1263
    %v1265 = vpop.f32.mrb[0].mxu0
    %v1266 = vadd.f32 %v1124, %v1265
    %1267 = vmatprep.mubr.f32.mxu0 0.0
    %1268 = vmatmul.mubr.f32.gmra.mrb[0].mxu0 %v1153
    %v1269 = vpop.f32.mrb[0].mxu0
    %v1270 = vadd.f32 %v1128, %v1269
    %v1271 = vpop.f32.mrb[0].mxu0
    %v1272 = vadd.f32 %v1128, %v1271
    %1273 = vmatprep.mubr.f32.mxu0 0.0
    %1274 = vmatmul.mubr.f32.gmra.mrb[0].mxu0 %v1156
    %v1275 = vpop.f32.mrb[0].mxu0
    %v1276 = vadd.f32 %v1132, %v1275
    %v1277 = vpop.f32.mrb[0].mxu0
    %v1278 = vadd.f32 %v1132, %v1277
    %1279 = vmatprep.mubr.f32.mxu0 0.0
    %1280 = vmatmul.mubr.f32.gmra.mrb[0].mxu0 %v1159
    %v1281 = vpop.f32.mrb[0].mxu0
    %v1282 = vadd.f32 %v1136, %v1281
    %v1283 = vpop.f32.mrb[0].mxu0
    %v1284 = vadd.f32 %v1136, %v1283
    %1285 = vmatprep.mubr.f32.mxu0 0.0
    %1286 = vmatmul.mubr.f32.gmra.mrb[0].mxu0 %v1162
    %v1287 = vpop.f32.mrb[0].mxu0
    %v1288 = vadd.f32 %v1140, %v1287
    %v1289 = vpop.f32.mrb[0].mxu0
    %v1290 = vadd.f32 %v1140, %v1289
    %1291 = vmatprep.mubr.f32.mxu0 0.0
    %1292 = vmatmul.mubr.f32.gmra.mrb[0].mxu0 %v1165
    %v1293 = vpop.f32.mrb[0].mxu0
    %v1294 = vadd.f32 %v1144, %v1293
    %v1295 = vpop.f32.mrb[0].mxu0
    %v1296 = vadd.f32 %v1144, %v1295
    %1297 = vdwg.mxu0
    %1298 = vmatprep.subr.mxu0 %v1057
    %1299 = vmatpush1.msra.mxu0 %v1056
    %1300 = vmatprep.subr.mxu0 %v1065
    %1301 = vmatpush1.msra.mxu0 %v1064
    %1302 = vmatprep.subr.mxu0 %v1073
    %1303 = vmatpush1.msra.mxu0 %v1072
    %1304 = vmatprep.subr.mxu0 %v1081
    %1305 = vmatpush1.msra.mxu0 %v1080
    %1306 = vmatprep.subr.mxu0 %v1089
    %1307 = vmatpush1.msra.mxu0 %v1088
    %1308 = vmatprep.subr.mxu0 %v1097
    %1309 = vmatpush1.msra.mxu0 %v1096
    %1310 = vmatprep.subr.mxu0 %v1177
    %1311 = vmatpush1.msra.mxu0 %v1174
    %1312 = vmatprep.subr.mxu0 0.0
    %1313 = vmatpush1.msra.mxu0 0.0
    %1314 = vmatprep.subr.mxu0 0.0
    %1315 = vmatpush1.msra.mxu0 0.0
    %1316 = vmatprep.subr.mxu0 0.0
    %1317 = vmatpush1.msra.mxu0 0.0
    %1318 = vmatprep.subr.mxu0 0.0
    %1319 = vmatpush1.msra.mxu0 0.0
    %1320 = vmatprep.subr.mxu0 0.0
    %1321 = vmatpush1.msra.mxu0 0.0
    %1322 = vmatprep.subr.mxu0 0.0
    %1323 = vmatpush1.msra.mxu0 0.0
    %1324 = vmatprep.subr.mxu0 0.0
    %1325 = vmatpush1.msra.mxu0 0.0
    %1326 = vmatprep.subr.mxu0 0.0
    %1327 = vmatpush1.msra.mxu0 0.0
    %1328 = vmatprep.subr.mxu0 0.0
    %1329 = vmatpush1.msra.mxu0 0.0
    %1330 = vmatprep.subr.mxu0 0.0
    %1331 = vmatpush1.msra.mxu0 0.0
    %1332 = vmatprep.subr.mxu0 0.0
    %1333 = vmatpush1.msra.mxu0 0.0
    %1334 = vmatprep.subr.mxu0 0.0
    %1335 = vmatpush1.msra.mxu0 0.0
    %1336 = vmatprep.subr.mxu0 0.0
    %1337 = vmatpush1.msra.mxu0 0.0
    %1338 = vmatprep.subr.mxu0 0.0
    %1339 = vmatpush1.msra.mxu0 0.0
    %1340 = vmatprep.subr.mxu0 0.0
    %1341 = vmatpush1.msra.mxu0 0.0
    %1342 = vmatprep.subr.mxu0 0.0
    %1343 = vmatpush1.msra.mxu0 0.0
    %1344 = vmatprep.subr.mxu0 0.0
    %1345 = vmatpush1.msra.mxu0 0.0
    %1346 = vmatprep.subr.mxu0 0.0
    %1347 = vmatpush1.msra.mxu0 0.0
    %1348 = vmatprep.subr.mxu0 0.0
    %1349 = vmatpush1.msra.mxu0 0.0
    %1350 = vmatprep.subr.mxu0 0.0
    %1351 = vmatpush1.msra.mxu0 0.0
    %1352 = vmatprep.subr.mxu0 0.0
    %1353 = vmatpush1.msra.mxu0 0.0
    %1354 = vmatprep.subr.mxu0 0.0
    %1355 = vmatpush1.msra.mxu0 0.0
    %1356 = vmatprep.subr.mxu0 0.0
    %1357 = vmatpush1.msra.mxu0 0.0
    %1358 = vmatprep.subr.mxu0 0.0
    %1359 = vmatpush1.msra.mxu0 0.0
    %1360 = vmatprep.subr.mxu0 0.0
    %1361 = vmatpush1.msra.mxu0 0.0
    %1362 = vmatprep.mubr.f32.mxu0 0.0
    %1363 = vmatmul.mubr.f32.gmra.mrb[0].mxu0 %v1147
    %v1364 = vpop.f32.mrb[0].mxu0
    %v1365 = vadd.f32 %v1120, %v1364
    %v1366 = vpop.f32.mrb[0].mxu0
    %v1367 = vadd.f32 %v1120, %v1366
    %1368 = vmatprep.mubr.f32.mxu0 0.0
    %1369 = vmatmul.mubr.f32.gmra.mrb[0].mxu0 %v1150
    %v1370 = vpop.f32.mrb[0].mxu0
    %v1371 = vadd.f32 %v1124, %v1370
    %v1372 = vpop.f32.mrb[0].mxu0
    %v1373 = vadd.f32 %v1124, %v1372
    %1374 = vmatprep.mubr.f32.mxu0 0.0
    %1375 = vmatmul.mubr.f32.gmra.mrb[0].mxu0 %v1153
    %v1376 = vpop.f32.mrb[0].mxu0
    %v1377 = vadd.f32 %v1128, %v1376
    %v1378 = vpop.f32.mrb[0].mxu0
    %v1379 = vadd.f32 %v1128, %v1378
    %1380 = vmatprep.mubr.f32.mxu0 0.0
    %1381 = vmatmul.mubr.f32.gmra.mrb[0].mxu0 %v1156
    %v1382 = vpop.f32.mrb[0].mxu0
    %v1383 = vadd.f32 %v1132, %v1382
    %v1384 = vpop.f32.mrb[0].mxu0
    %v1385 = vadd.f32 %v1132, %v1384
    %1386 = vmatprep.mubr.f32.mxu0 0.0
    %1387 = vmatmul.mubr.f32.gmra.mrb[0].mxu0 %v1159
    %v1388 = vpop.f32.mrb[0].mxu0
    %v1389 = vadd.f32 %v1136, %v1388
    %v1390 = vpop.f32.mrb[0].mxu0
    %v1391 = vadd.f32 %v1136, %v1390
    %1392 = vmatprep.mubr.f32.mxu0 0.0
    %1393 = vmatmul.mubr.f32.gmra.mrb[0].mxu0 %v1162
    %v1394 = vpop.f32.mrb[0].mxu0
    %v1395 = vadd.f32 %v1140, %v1394
    %v1396 = vpop.f32.mrb[0].mxu0
    %v1397 = vadd.f32 %v1140, %v1396
    %1398 = vmatprep.mubr.f32.mxu0 0.0
    %1399 = vmatmul.mubr.f32.gmra.mrb[0].mxu0 %v1165
    %v1400 = vpop.f32.mrb[0].mxu0
    %v1401 = vadd.f32 %v1144, %v1400
    %v1402 = vpop.f32.mrb[0].mxu0
    %v1403 = vadd.f32 %v1144, %v1402
    %1404 = vdwg.mxu0
    %1405 = vmatprep.subr.mxu0 %v1059
    %1406 = vmatpush1.msra.mxu0 %v1058
    %1407 = vmatprep.subr.mxu0 %v1067
    %1408 = vmatpush1.msra.mxu0 %v1066
    %1409 = vmatprep.subr.mxu0 %v1075
    %1410 = vmatpush1.msra.mxu0 %v1074
    %1411 = vmatprep.subr.mxu0 %v1083
    %1412 = vmatpush1.msra.mxu0 %v1082
    %1413 = vmatprep.subr.mxu0 %v1091
    %1414 = vmatpush1.msra.mxu0 %v1090
    %1415 = vmatprep.subr.mxu0 %v1099
    %1416 = vmatpush1.msra.mxu0 %v1098
    %1417 = vmatprep.subr.mxu0 %v1183
    %1418 = vmatpush1.msra.mxu0 %v1180
    %1419 = vmatprep.subr.mxu0 0.0
    %1420 = vmatpush1.msra.mxu0 0.0
    %1421 = vmatprep.subr.mxu0 0.0
    %1422 = vmatpush1.msra.mxu0 0.0
    %1423 = vmatprep.subr.mxu0 0.0
    %1424 = vmatpush1.msra.mxu0 0.0
    %1425 = vmatprep.subr.mxu0 0.0
    %1426 = vmatpush1.msra.mxu0 0.0
    %1427 = vmatprep.subr.mxu0 0.0
    %1428 = vmatpush1.msra.mxu0 0.0
    %1429 = vmatprep.subr.mxu0 0.0
    %1430 = vmatpush1.msra.mxu0 0.0
    %1431 = vmatprep.subr.mxu0 0.0
    %1432 = vmatpush1.msra.mxu0 0.0
    %1433 = vmatprep.subr.mxu0 0.0
    %1434 = vmatpush1.msra.mxu0 0.0
    %1435 = vmatprep.subr.mxu0 0.0
    %1436 = vmatpush1.msra.mxu0 0.0
    %1437 = vmatprep.subr.mxu0 0.0
    %1438 = vmatpush1.msra.mxu0 0.0
    %1439 = vmatprep.subr.mxu0 0.0
    %1440 = vmatpush1.msra.mxu0 0.0
    %1441 = vmatprep.subr.mxu0 0.0
    %1442 = vmatpush1.msra.mxu0 0.0
    %1443 = vmatprep.subr.mxu0 0.0
    %1444 = vmatpush1.msra.mxu0 0.0
    %1445 = vmatprep.subr.mxu0 0.0
    %1446 = vmatpush1.msra.mxu0 0.0
    %1447 = vmatprep.subr.mxu0 0.0
    %1448 = vmatpush1.msra.mxu0 0.0
    %1449 = vmatprep.subr.mxu0 0.0
    %1450 = vmatpush1.msra.mxu0 0.0
    %1451 = vmatprep.subr.mxu0 0.0
    %1452 = vmatpush1.msra.mxu0 0.0
    %1453 = vmatprep.subr.mxu0 0.0
    %1454 = vmatpush1.msra.mxu0 0.0
    %1455 = vmatprep.subr.mxu0 0.0
    %1456 = vmatpush1.msra.mxu0 0.0
    %1457 = vmatprep.subr.mxu0 0.0
    %1458 = vmatpush1.msra.mxu0 0.0
    %1459 = vmatprep.subr.mxu0 0.0
    %1460 = vmatpush1.msra.mxu0 0.0
    %1461 = vmatprep.subr.mxu0 0.0
    %1462 = vmatpush1.msra.mxu0 0.0
    %1463 = vmatprep.subr.mxu0 0.0
    %1464 = vmatpush1.msra.mxu0 0.0
    %1465 = vmatprep.subr.mxu0 0.0
    %1466 = vmatpush1.msra.mxu0 0.0
    %1467 = vmatprep.subr.mxu0 0.0
    %1468 = vmatpush1.msra.mxu0 0.0
    %1469 = vmatprep.mubr.f32.mxu0 0.0
    %1470 = vmatmul.mubr.f32.gmra.mrb[0].mxu0 %v1147
    %v1471 = vpop.f32.mrb[0].mxu0
    %v1472 = vadd.f32 %v1120, %v1471
    %v1473 = vpop.f32.mrb[0].mxu0
    %v1474 = vadd.f32 %v1120, %v1473
    %1475 = vmatprep.mubr.f32.mxu0 0.0
    %1476 = vmatmul.mubr.f32.gmra.mrb[0].mxu0 %v1150
    %v1477 = vpop.f32.mrb[0].mxu0
    %v1478 = vadd.f32 %v1124, %v1477
    %v1479 = vpop.f32.mrb[0].mxu0
    %v1480 = vadd.f32 %v1124, %v1479
    %1481 = vmatprep.mubr.f32.mxu0 0.0
    %1482 = vmatmul.mubr.f32.gmra.mrb[0].mxu0 %v1153
    %v1483 = vpop.f32.mrb[0].mxu0
    %v1484 = vadd.f32 %v1128, %v1483
    %v1485 = vpop.f32.mrb[0].mxu0
    %v1486 = vadd.f32 %v1128, %v1485
    %1487 = vmatprep.mubr.f32.mxu0 0.0
    %1488 = vmatmul.mubr.f32.gmra.mrb[0].mxu0 %v1156
    %v1489 = vpop.f32.mrb[0].mxu0
    %v1490 = vadd.f32 %v1132, %v1489
    %v1491 = vpop.f32.mrb[0].mxu0
    %v1492 = vadd.f32 %v1132, %v1491
    %1493 = vmatprep.mubr.f32.mxu0 0.0
    %1494 = vmatmul.mubr.f32.gmra.mrb[0].mxu0 %v1159
    %v1495 = vpop.f32.mrb[0].mxu0
    %v1496 = vadd.f32 %v1136, %v1495
    %v1497 = vpop.f32.mrb[0].mxu0
    %v1498 = vadd.f32 %v1136, %v1497
    %1499 = vmatprep.mubr.f32.mxu0 0.0
    %1500 = vmatmul.mubr.f32.gmra.mrb[0].mxu0 %v1162
    %v1501 = vpop.f32.mrb[0].mxu0
    %v1502 = vadd.f32 %v1140, %v1501
    %v1503 = vpop.f32.mrb[0].mxu0
    %v1504 = vadd.f32 %v1140, %v1503
    %1505 = vmatprep.mubr.f32.mxu0 0.0
    %1506 = vmatmul.mubr.f32.gmra.mrb[0].mxu0 %v1165
    %v1507 = vpop.f32.mrb[0].mxu0
    %v1508 = vadd.f32 %v1144, %v1507
    %v1509 = vpop.f32.mrb[0].mxu0
    %v1510 = vadd.f32 %v1144, %v1509
    %1511 = vdwg.mxu0
    %1512 = vmatprep.subr.mxu0 %v1061
    %1513 = vmatpush1.msra.mxu0 %v1060
    %1514 = vmatprep.subr.mxu0 %v1069
    %1515 = vmatpush1.msra.mxu0 %v1068
    %1516 = vmatprep.subr.mxu0 %v1077
    %1517 = vmatpush1.msra.mxu0 %v1076
    %1518 = vmatprep.subr.mxu0 %v1085
    %1519 = vmatpush1.msra.mxu0 %v1084
    %1520 = vmatprep.subr.mxu0 %v1093
    %1521 = vmatpush1.msra.mxu0 %v1092
    %1522 = vmatprep.subr.mxu0 %v1101
    %1523 = vmatpush1.msra.mxu0 %v1100
    %1524 = vmatprep.subr.mxu0 %v1189
    %1525 = vmatpush1.msra.mxu0 %v1186
    %1526 = vmatprep.subr.mxu0 0.0
    %1527 = vmatpush1.msra.mxu0 0.0
    %1528 = vmatprep.subr.mxu0 0.0
    %1529 = vmatpush1.msra.mxu0 0.0
    %1530 = vmatprep.subr.mxu0 0.0
    %1531 = vmatpush1.msra.mxu0 0.0
    %1532 = vmatprep.subr.mxu0 0.0
    %1533 = vmatpush1.msra.mxu0 0.0
    %1534 = vmatprep.subr.mxu0 0.0
    %1535 = vmatpush1.msra.mxu0 0.0
    %1536 = vmatprep.subr.mxu0 0.0
    %1537 = vmatpush1.msra.mxu0 0.0
    %1538 = vmatprep.subr.mxu0 0.0
    %1539 = vmatpush1.msra.mxu0 0.0
    %1540 = vmatprep.subr.mxu0 0.0
    %1541 = vmatpush1.msra.mxu0 0.0
    %1542 = vmatprep.subr.mxu0 0.0
    %1543 = vmatpush1.msra.mxu0 0.0
    %1544 = vmatprep.subr.mxu0 0.0
    %1545 = vmatpush1.msra.mxu0 0.0
    %1546 = vmatprep.subr.mxu0 0.0
    %1547 = vmatpush1.msra.mxu0 0.0
    %1548 = vmatprep.subr.mxu0 0.0
    %1549 = vmatpush1.msra.mxu0 0.0
    %1550 = vmatprep.subr.mxu0 0.0
    %1551 = vmatpush1.msra.mxu0 0.0
    %1552 = vmatprep.subr.mxu0 0.0
    %1553 = vmatpush1.msra.mxu0 0.0
    %1554 = vmatprep.subr.mxu0 0.0
    %1555 = vmatpush1.msra.mxu0 0.0
    %1556 = vmatprep.subr.mxu0 0.0
    %1557 = vmatpush1.msra.mxu0 0.0
    %1558 = vmatprep.subr.mxu0 0.0
    %1559 = vmatpush1.msra.mxu0 0.0
    %1560 = vmatprep.subr.mxu0 0.0
    %1561 = vmatpush1.msra.mxu0 0.0
    %1562 = vmatprep.subr.mxu0 0.0
    %1563 = vmatpush1.msra.mxu0 0.0
    %1564 = vmatprep.subr.mxu0 0.0
    %1565 = vmatpush1.msra.mxu0 0.0
    %1566 = vmatprep.subr.mxu0 0.0
    %1567 = vmatpush1.msra.mxu0 0.0
    %1568 = vmatprep.subr.mxu0 0.0
    %1569 = vmatpush1.msra.mxu0 0.0
    %1570 = vmatprep.subr.mxu0 0.0
    %1571 = vmatpush1.msra.mxu0 0.0
    %1572 = vmatprep.subr.mxu0 0.0
    %1573 = vmatpush1.msra.mxu0 0.0
    %1574 = vmatprep.subr.mxu0 0.0
    %1575 = vmatpush1.msra.mxu0 0.0
    %1576 = vmatprep.mubr.f32.mxu0 0.0
    %1577 = vmatmul.mubr.f32.gmra.mrb[0].mxu0 %v1147
    %v1578 = vpop.f32.mrb[0].mxu0
    %v1579 = vadd.f32 %v1120, %v1578
    %v1580 = vpop.f32.mrb[0].mxu0
    %v1581 = vadd.f32 %v1120, %v1580
    %1582 = vmatprep.mubr.f32.mxu0 0.0
    %1583 = vmatmul.mubr.f32.gmra.mrb[0].mxu0 %v1150
    %v1584 = vpop.f32.mrb[0].mxu0
    %v1585 = vadd.f32 %v1124, %v1584
    %v1586 = vpop.f32.mrb[0].mxu0
    %v1587 = vadd.f32 %v1124, %v1586
    %1588 = vmatprep.mubr.f32.mxu0 0.0
    %1589 = vmatmul.mubr.f32.gmra.mrb[0].mxu0 %v1153
    %v1590 = vpop.f32.mrb[0].mxu0
    %v1591 = vadd.f32 %v1128, %v1590
    %v1592 = vpop.f32.mrb[0].mxu0
    %v1593 = vadd.f32 %v1128, %v1592
    %1594 = vmatprep.mubr.f32.mxu0 0.0
    %1595 = vmatmul.mubr.f32.gmra.mrb[0].mxu0 %v1156
    %v1596 = vpop.f32.mrb[0].mxu0
    %v1597 = vadd.f32 %v1132, %v1596
    %v1598 = vpop.f32.mrb[0].mxu0
    %v1599 = vadd.f32 %v1132, %v1598
    %1600 = vmatprep.mubr.f32.mxu0 0.0
    %1601 = vmatmul.mubr.f32.gmra.mrb[0].mxu0 %v1159
    %v1602 = vpop.f32.mrb[0].mxu0
    %v1603 = vadd.f32 %v1136, %v1602
    %v1604 = vpop.f32.mrb[0].mxu0
    %v1605 = vadd.f32 %v1136, %v1604
    %1606 = vmatprep.mubr.f32.mxu0 0.0
    %1607 = vmatmul.mubr.f32.gmra.mrb[0].mxu0 %v1162
    %v1608 = vpop.f32.mrb[0].mxu0
    %v1609 = vadd.f32 %v1140, %v1608
    %v1610 = vpop.f32.mrb[0].mxu0
    %v1611 = vadd.f32 %v1140, %v1610
    %1612 = vmatprep.mubr.f32.mxu0 0.0
    %1613 = vmatmul.mubr.f32.gmra.mrb[0].mxu0 %v1165
    %v1614 = vpop.f32.mrb[0].mxu0
    %v1615 = vadd.f32 %v1144, %v1614
    %v1616 = vpop.f32.mrb[0].mxu0
    %v1617 = vadd.f32 %v1144, %v1616
    %1618 = vdwg.mxu0
    %v1619 = vtanh.pop %v1258
    %v1620 = vtanh.pop %v1260
    %v1621 = vtanh.pop %v1365
    %v1622 = vtanh.pop %v1367
    %v1623 = vtanh.pop %v1472
    %v1624 = vtanh.pop %v1474
    %v1625 = vtanh.pop %v1579
    %v1626 = vtanh.pop %v1581
    %v1627 = vtanh.pop %v1264
    %v1628 = vtanh.pop %v1266
    %v1629 = vtanh.pop %v1371
    %v1630 = vtanh.pop %v1373
    %v1631 = vtanh.pop %v1478
    %v1632 = vtanh.pop %v1480
    %v1633 = vtanh.pop %v1585
    %v1634 = vtanh.pop %v1587
    %v1635 = vtanh.pop %v1270
    %v1636 = vtanh.pop %v1272
    %v1637 = vtanh.pop %v1377
    %v1638 = vtanh.pop %v1379
    %v1639 = vtanh.pop %v1484
    %v1640 = vtanh.pop %v1486
    %v1641 = vtanh.pop %v1591
    %v1642 = vtanh.pop %v1593
    %v1643 = vtanh.pop %v1276
    %v1644 = vtanh.pop %v1278
    %v1645 = vtanh.pop %v1383
    %v1646 = vtanh.pop %v1385
    %v1647 = vtanh.pop %v1490
    %v1648 = vtanh.pop %v1492
    %v1649 = vtanh.pop %v1597
    %v1650 = vtanh.pop %v1599
    %v1651 = vtanh.pop %v1282
    %v1652 = vtanh.pop %v1284
    %v1653 = vtanh.pop %v1389
    %v1654 = vtanh.pop %v1391
    %v1655 = vtanh.pop %v1496
    %v1656 = vtanh.pop %v1498
    %v1657 = vtanh.pop %v1603
    %v1658 = vtanh.pop %v1605
    %v1659 = vtanh.pop %v1288
    %v1660 = vtanh.pop %v1290
    %v1661 = vtanh.pop %v1395
    %v1662 = vtanh.pop %v1397
    %v1663 = vtanh.pop %v1502
    %v1664 = vtanh.pop %v1504
    %v1665 = vtanh.pop %v1609
    %v1666 = vtanh.pop %v1611
    %v1667 = vtanh.pop %v1294
    %v1668 = vtanh.pop %v1296
    %v1669 = vtanh.pop %v1401
    %v1670 = vtanh.pop %v1403
    %v1671 = vtanh.pop %v1508
    %v1672 = vtanh.pop %v1510
    %v1673 = vtanh.pop %v1615
    %v1674 = vtanh.pop %v1617
    %v1675 = vld [vmem:[%s3] sm:$0x3]
    %1677 = vset.pattern.permute.xlu0 50
    %1678 = vperm.xlu0 %1677, %v1675
    %v1679 = vpop.permute.xlu0 %1678
    %v1681 = vsel %vm579, %v1675, 0
    %v1684 = vsel %vm601, %v1667, 0
    %v1687 = vsel %vm601, %v1668, 0
    %v1690 = vsel %vm601, %v1669, 0
    %v1693 = vsel %vm601, %v1670, 0
    %v1696 = vsel %vm601, %v1671, 0
    %v1699 = vsel %vm601, %v1672, 0
    %v1702 = vsel %vm601, %v1673, 0
    %v1705 = vsel %vm601, %v1674, 0
    %1707 = vmatprep.subr.mxu0 %v1620
    %1708 = vmatpush1.msra.mxu0 %v1619
    %1709 = vmatprep.subr.mxu0 %v1628
    %1710 = vmatpush1.msra.mxu0 %v1627
    %1711 = vmatprep.subr.mxu0 %v1636
    %1712 = vmatpush1.msra.mxu0 %v1635
    %1713 = vmatprep.subr.mxu0 %v1644
    %1714 = vmatpush1.msra.mxu0 %v1643
    %1715 = vmatprep.subr.mxu0 %v1652
    %1716 = vmatpush1.msra.mxu0 %v1651
    %1717 = vmatprep.subr.mxu0 %v1660
    %1718 = vmatpush1.msra.mxu0 %v1659
    %1719 = vmatprep.subr.mxu0 %v1687
    %1720 = vmatpush1.msra.mxu0 %v1684
    %1721 = vmatprep.subr.mxu0 0.0
    %1722 = vmatpush1.msra.mxu0 0.0
    %1723 = vmatprep.subr.mxu0 0.0
    %1724 = vmatpush1.msra.mxu0 0.0
    %1725 = vmatprep.subr.mxu0 0.0
    %1726 = vmatpush1.msra.mxu0 0.0
    %1727 = vmatprep.subr.mxu0 0.0
    %1728 = vmatpush1.msra.mxu0 0.0
    %1729 = vmatprep.subr.mxu0 0.0
    %1730 = vmatpush1.msra.mxu0 0.0
    %1731 = vmatprep.subr.mxu0 0.0
    %1732 = vmatpush1.msra.mxu0 0.0
    %1733 = vmatprep.subr.mxu0 0.0
    %1734 = vmatpush1.msra.mxu0 0.0
    %1735 = vmatprep.subr.mxu0 0.0
    %1736 = vmatpush1.msra.mxu0 0.0
    %1737 = vmatprep.subr.mxu0 0.0
    %1738 = vmatpush1.msra.mxu0 0.0
    %1739 = vmatprep.subr.mxu0 0.0
    %1740 = vmatpush1.msra.mxu0 0.0
    %1741 = vmatprep.subr.mxu0 0.0
    %1742 = vmatpush1.msra.mxu0 0.0
    %1743 = vmatprep.subr.mxu0 0.0
    %1744 = vmatpush1.msra.mxu0 0.0
    %1745 = vmatprep.subr.mxu0 0.0
    %1746 = vmatpush1.msra.mxu0 0.0
    %1747 = vmatprep.subr.mxu0 0.0
    %1748 = vmatpush1.msra.mxu0 0.0
    %1749 = vmatprep.subr.mxu0 0.0
    %1750 = vmatpush1.msra.mxu0 0.0
    %1751 = vmatprep.subr.mxu0 0.0
    %1752 = vmatpush1.msra.mxu0 0.0
    %1753 = vmatprep.subr.mxu0 0.0
    %1754 = vmatpush1.msra.mxu0 0.0
    %1755 = vmatprep.subr.mxu0 0.0
    %1756 = vmatpush1.msra.mxu0 0.0
    %1757 = vmatprep.subr.mxu0 0.0
    %1758 = vmatpush1.msra.mxu0 0.0
    %1759 = vmatprep.subr.mxu0 0.0
    %1760 = vmatpush1.msra.mxu0 0.0
    %1761 = vmatprep.subr.mxu0 0.0
    %1762 = vmatpush1.msra.mxu0 0.0
    %1763 = vmatprep.subr.mxu0 0.0
    %1764 = vmatpush1.msra.mxu0 0.0
    %1765 = vmatprep.subr.mxu0 0.0
    %1766 = vmatpush1.msra.mxu0 0.0
    %1767 = vmatprep.subr.mxu0 0.0
    %1768 = vmatpush1.msra.mxu0 0.0
    %1769 = vmatprep.subr.mxu0 0.0
    %1770 = vmatpush1.msra.mxu0 0.0
    %1771 = vmatprep.mubr.f32.mxu0 0.0
    %1772 = vmatmul.mubr.f32.gmra.mrb[0].mxu0 %v1681
    %v1773 = vpop.f32.mrb[0].mxu0
    %v1774 = vadd.f32 %v1679, %v1773
    %v1775 = vpop.f32.mrb[0].mxu0
    %v1776 = vadd.f32 %v1679, %v1775
    %1777 = vdwg.mxu0
    %1778 = vmatprep.subr.mxu0 %v1622
    %1779 = vmatpush1.msra.mxu0 %v1621
    %1780 = vmatprep.subr.mxu0 %v1630
    %1781 = vmatpush1.msra.mxu0 %v1629
    %1782 = vmatprep.subr.mxu0 %v1638
    %1783 = vmatpush1.msra.mxu0 %v1637
    %1784 = vmatprep.subr.mxu0 %v1646
    %1785 = vmatpush1.msra.mxu0 %v1645
    %1786 = vmatprep.subr.mxu0 %v1654
    %1787 = vmatpush1.msra.mxu0 %v1653
    %1788 = vmatprep.subr.mxu0 %v1662
    %1789 = vmatpush1.msra.mxu0 %v1661
    %1790 = vmatprep.subr.mxu0 %v1693
    %1791 = vmatpush1.msra.mxu0 %v1690
    %1792 = vmatprep.subr.mxu0 0.0
    %1793 = vmatpush1.msra.mxu0 0.0
    %1794 = vmatprep.subr.mxu0 0.0
    %1795 = vmatpush1.msra.mxu0 0.0
    %1796 = vmatprep.subr.mxu0 0.0
    %1797 = vmatpush1.msra.mxu0 0.0
    %1798 = vmatprep.subr.mxu0 0.0
    %1799 = vmatpush1.msra.mxu0 0.0
    %1800 = vmatprep.subr.mxu0 0.0
    %1801 = vmatpush1.msra.mxu0 0.0
    %1802 = vmatprep.subr.mxu0 0.0
    %1803 = vmatpush1.msra.mxu0 0.0
    %1804 = vmatprep.subr.mxu0 0.0
    %1805 = vmatpush1.msra.mxu0 0.0
    %1806 = vmatprep.subr.mxu0 0.0
    %1807 = vmatpush1.msra.mxu0 0.0
    %1808 = vmatprep.subr.mxu0 0.0
    %1809 = vmatpush1.msra.mxu0 0.0
    %1810 = vmatprep.subr.mxu0 0.0
    %1811 = vmatpush1.msra.mxu0 0.0
    %1812 = vmatprep.subr.mxu0 0.0
    %1813 = vmatpush1.msra.mxu0 0.0
    %1814 = vmatprep.subr.mxu0 0.0
    %1815 = vmatpush1.msra.mxu0 0.0
    %1816 = vmatprep.subr.mxu0 0.0
    %1817 = vmatpush1.msra.mxu0 0.0
    %1818 = vmatprep.subr.mxu0 0.0
    %1819 = vmatpush1.msra.mxu0 0.0
    %1820 = vmatprep.subr.mxu0 0.0
    %1821 = vmatpush1.msra.mxu0 0.0
    %1822 = vmatprep.subr.mxu0 0.0
    %1823 = vmatpush1.msra.mxu0 0.0
    %1824 = vmatprep.subr.mxu0 0.0
    %1825 = vmatpush1.msra.mxu0 0.0
    %1826 = vmatprep.subr.mxu0 0.0
    %1827 = vmatpush1.msra.mxu0 0.0
    %1828 = vmatprep.subr.mxu0 0.0
    %1829 = vmatpush1.msra.mxu0 0.0
    %1830 = vmatprep.subr.mxu0 0.0
    %1831 = vmatpush1.msra.mxu0 0.0
    %1832 = vmatprep.subr.mxu0 0.0
    %1833 = vmatpush1.msra.mxu0 0.0
    %1834 = vmatprep.subr.mxu0 0.0
    %1835 = vmatpush1.msra.mxu0 0.0
    %1836 = vmatprep.subr.mxu0 0.0
    %1837 = vmatpush1.msra.mxu0 0.0
    %1838 = vmatprep.subr.mxu0 0.0
    %1839 = vmatpush1.msra.mxu0 0.0
    %1840 = vmatprep.subr.mxu0 0.0
    %1841 = vmatpush1.msra.mxu0 0.0
    %1842 = vmatprep.mubr.f32.mxu0 0.0
    %1843 = vmatmul.mubr.f32.gmra.mrb[0].mxu0 %v1681
    %v1844 = vpop.f32.mrb[0].mxu0
    %v1845 = vadd.f32 %v1679, %v1844
    %v1846 = vpop.f32.mrb[0].mxu0
    %v1847 = vadd.f32 %v1679, %v1846
    %1848 = vdwg.mxu0
    %1849 = vmatprep.subr.mxu0 %v1624
    %1850 = vmatpush1.msra.mxu0 %v1623
    %1851 = vmatprep.subr.mxu0 %v1632
    %1852 = vmatpush1.msra.mxu0 %v1631
    %1853 = vmatprep.subr.mxu0 %v1640
    %1854 = vmatpush1.msra.mxu0 %v1639
    %1855 = vmatprep.subr.mxu0 %v1648
    %1856 = vmatpush1.msra.mxu0 %v1647
    %1857 = vmatprep.subr.mxu0 %v1656
    %1858 = vmatpush1.msra.mxu0 %v1655
    %1859 = vmatprep.subr.mxu0 %v1664
    %1860 = vmatpush1.msra.mxu0 %v1663
    %1861 = vmatprep.subr.mxu0 %v1699
    %1862 = vmatpush1.msra.mxu0 %v1696
    %1863 = vmatprep.subr.mxu0 0.0
    %1864 = vmatpush1.msra.mxu0 0.0
    %1865 = vmatprep.subr.mxu0 0.0
    %1866 = vmatpush1.msra.mxu0 0.0
    %1867 = vmatprep.subr.mxu0 0.0
    %1868 = vmatpush1.msra.mxu0 0.0
    %1869 = vmatprep.subr.mxu0 0.0
    %1870 = vmatpush1.msra.mxu0 0.0
    %1871 = vmatprep.subr.mxu0 0.0
    %1872 = vmatpush1.msra.mxu0 0.0
    %1873 = vmatprep.subr.mxu0 0.0
    %1874 = vmatpush1.msra.mxu0 0.0
    %1875 = vmatprep.subr.mxu0 0.0
    %1876 = vmatpush1.msra.mxu0 0.0
    %1877 = vmatprep.subr.mxu0 0.0
    %1878 = vmatpush1.msra.mxu0 0.0
    %1879 = vmatprep.subr.mxu0 0.0
    %1880 = vmatpush1.msra.mxu0 0.0
    %1881 = vmatprep.subr.mxu0 0.0
    %1882 = vmatpush1.msra.mxu0 0.0
    %1883 = vmatprep.subr.mxu0 0.0
    %1884 = vmatpush1.msra.mxu0 0.0
    %1885 = vmatprep.subr.mxu0 0.0
    %1886 = vmatpush1.msra.mxu0 0.0
    %1887 = vmatprep.subr.mxu0 0.0
    %1888 = vmatpush1.msra.mxu0 0.0
    %1889 = vmatprep.subr.mxu0 0.0
    %1890 = vmatpush1.msra.mxu0 0.0
    %1891 = vmatprep.subr.mxu0 0.0
    %1892 = vmatpush1.msra.mxu0 0.0
    %1893 = vmatprep.subr.mxu0 0.0
    %1894 = vmatpush1.msra.mxu0 0.0
    %1895 = vmatprep.subr.mxu0 0.0
    %1896 = vmatpush1.msra.mxu0 0.0
    %1897 = vmatprep.subr.mxu0 0.0
    %1898 = vmatpush1.msra.mxu0 0.0
    %1899 = vmatprep.subr.mxu0 0.0
    %1900 = vmatpush1.msra.mxu0 0.0
    %1901 = vmatprep.subr.mxu0 0.0
    %1902 = vmatpush1.msra.mxu0 0.0
    %1903 = vmatprep.subr.mxu0 0.0
    %1904 = vmatpush1.msra.mxu0 0.0
    %1905 = vmatprep.subr.mxu0 0.0
    %1906 = vmatpush1.msra.mxu0 0.0
    %1907 = vmatprep.subr.mxu0 0.0
    %1908 = vmatpush1.msra.mxu0 0.0
    %1909 = vmatprep.subr.mxu0 0.0
    %1910 = vmatpush1.msra.mxu0 0.0
    %1911 = vmatprep.subr.mxu0 0.0
    %1912 = vmatpush1.msra.mxu0 0.0
    %1913 = vmatprep.mubr.f32.mxu0 0.0
    %1914 = vmatmul.mubr.f32.gmra.mrb[0].mxu0 %v1681
    %v1915 = vpop.f32.mrb[0].mxu0
    %v1916 = vadd.f32 %v1679, %v1915
    %v1917 = vpop.f32.mrb[0].mxu0
    %v1918 = vadd.f32 %v1679, %v1917
    %1919 = vdwg.mxu0
    %1920 = vmatprep.subr.mxu0 %v1626
    %1921 = vmatpush1.msra.mxu0 %v1625
    %1922 = vmatprep.subr.mxu0 %v1634
    %1923 = vmatpush1.msra.mxu0 %v1633
    %1924 = vmatprep.subr.mxu0 %v1642
    %1925 = vmatpush1.msra.mxu0 %v1641
    %1926 = vmatprep.subr.mxu0 %v1650
    %1927 = vmatpush1.msra.mxu0 %v1649
    %1928 = vmatprep.subr.mxu0 %v1658
    %1929 = vmatpush1.msra.mxu0 %v1657
    %1930 = vmatprep.subr.mxu0 %v1666
    %1931 = vmatpush1.msra.mxu0 %v1665
    %1932 = vmatprep.subr.mxu0 %v1705
    %1933 = vmatpush1.msra.mxu0 %v1702
    %1934 = vmatprep.subr.mxu0 0.0
    %1935 = vmatpush1.msra.mxu0 0.0
    %1936 = vmatprep.subr.mxu0 0.0
    %1937 = vmatpush1.msra.mxu0 0.0
    %1938 = vmatprep.subr.mxu0 0.0
    %1939 = vmatpush1.msra.mxu0 0.0
    %1940 = vmatprep.subr.mxu0 0.0
    %1941 = vmatpush1.msra.mxu0 0.0
    %1942 = vmatprep.subr.mxu0 0.0
    %1943 = vmatpush1.msra.mxu0 0.0
    %1944 = vmatprep.subr.mxu0 0.0
    %1945 = vmatpush1.msra.mxu0 0.0
    %1946 = vmatprep.subr.mxu0 0.0
    %1947 = vmatpush1.msra.mxu0 0.0
    %1948 = vmatprep.subr.mxu0 0.0
    %1949 = vmatpush1.msra.mxu0 0.0
    %1950 = vmatprep.subr.mxu0 0.0
    %1951 = vmatpush1.msra.mxu0 0.0
    %1952 = vmatprep.subr.mxu0 0.0
    %1953 = vmatpush1.msra.mxu0 0.0
    %1954 = vmatprep.subr.mxu0 0.0
    %1955 = vmatpush1.msra.mxu0 0.0
    %1956 = vmatprep.subr.mxu0 0.0
    %1957 = vmatpush1.msra.mxu0 0.0
    %1958 = vmatprep.subr.mxu0 0.0
    %1959 = vmatpush1.msra.mxu0 0.0
    %1960 = vmatprep.subr.mxu0 0.0
    %1961 = vmatpush1.msra.mxu0 0.0
    %1962 = vmatprep.subr.mxu0 0.0
    %1963 = vmatpush1.msra.mxu0 0.0
    %1964 = vmatprep.subr.mxu0 0.0
    %1965 = vmatpush1.msra.mxu0 0.0
    %1966 = vmatprep.subr.mxu0 0.0
    %1967 = vmatpush1.msra.mxu0 0.0
    %1968 = vmatprep.subr.mxu0 0.0
    %1969 = vmatpush1.msra.mxu0 0.0
    %1970 = vmatprep.subr.mxu0 0.0
    %1971 = vmatpush1.msra.mxu0 0.0
    %1972 = vmatprep.subr.mxu0 0.0
    %1973 = vmatpush1.msra.mxu0 0.0
    %1974 = vmatprep.subr.mxu0 0.0
    %1975 = vmatpush1.msra.mxu0 0.0
    %1976 = vmatprep.subr.mxu0 0.0
    %1977 = vmatpush1.msra.mxu0 0.0
    %1978 = vmatprep.subr.mxu0 0.0
    %1979 = vmatpush1.msra.mxu0 0.0
    %1980 = vmatprep.subr.mxu0 0.0
    %1981 = vmatpush1.msra.mxu0 0.0
    %1982 = vmatprep.subr.mxu0 0.0
    %1983 = vmatpush1.msra.mxu0 0.0
    %1984 = vmatprep.mubr.f32.mxu0 0.0
    %1985 = vmatmul.mubr.f32.gmra.mrb[0].mxu0 %v1681
    %v1986 = vpop.f32.mrb[0].mxu0
    %v1987 = vadd.f32 %v1679, %v1986
    %v1988 = vpop.f32.mrb[0].mxu0
    %v1989 = vadd.f32 %v1679, %v1988
    %1990 = vdwg.mxu0
    %v1999 = vcombine.low %v1774, %v1776
    %v2000 = vcombine.low %v1845, %v1847
    %v2002 = vunpack.c.l.s4 1983009808
    %v2003 = vunpack.c.0.s8 %v2002
    %v2004 = vlaneseq
    %v2005 = vshrl.u32 %v2004, 7
    %v2006 = vsub.s32 %v2003, %v2005
    %v2007 = vrot.slane %v1999, %v2006
    %v2009 = vunpack.c.l.s4 1983009808
    %v2010 = vunpack.c.0.s8 %v2009
    %v2011 = vlaneseq
    %v2012 = vshrl.u32 %v2011, 7
    %v2013 = vsub.s32 %v2010, %v2012
    %v2014 = vrot.slane %v2000, %v2013
    %v2015 = vcombine.low %v2007, %v2014
    %v2016 = vcombine.low %v1916, %v1918
    %v2017 = vcombine.low %v1987, %v1989
    %v2019 = vunpack.c.l.s4 1983009808
    %v2020 = vunpack.c.0.s8 %v2019
    %v2021 = vlaneseq
    %v2022 = vshrl.u32 %v2021, 7
    %v2023 = vsub.s32 %v2020, %v2022
    %v2024 = vrot.slane %v2016, %v2023
    %v2026 = vunpack.c.l.s4 1983009808
    %v2027 = vunpack.c.0.s8 %v2026
    %v2028 = vlaneseq
    %v2029 = vshrl.u32 %v2028, 7
    %v2030 = vsub.s32 %v2027, %v2029
    %v2031 = vrot.slane %v2017, %v2030
    %v2032 = vcombine.low %v2024, %v2031
    %2035 = vst [vmem:[#allocation2] sm:$0xff] %v2015
    %2036 = vst [vmem:[#allocation2 + $0x8] sm:$0xff] %v2032
    // Predicated region
    $region18: #{tpu_custom_call.1} parent=1 // pred_check
      _
    $region19: #{tpu_custom_call.1} parent=1 // pred_check_branch
      %2038 = sbr.rel (0) target = $region21
    $region20: #{tpu_custom_call.1} parent=1 // pred_region
      %s2040 = ssub.s32 256, 256
      %2041 = vsyncadd [#allocation3], %s2040
      %s2043 = sshll.u32 [#allocation2], 4
      %s2044 = int_to_ptr.vmem [resolvable:$true] %s2043
      %2046 = dma.vmem_to_hbm [thread:$0]  %s2044, 256, %s4, [#allocation3]
    $region21: #{tpu_custom_call.1} parent=1 // pred_fallthru
      _
    // Predicated region
    $region22: #{tpu_custom_call.1} parent=1 // pred_check
      _
    $region23: #{tpu_custom_call.1} parent=1 // pred_check_branch
      %2048 = sbr.rel (0) target = $region25
    $region24: #{tpu_custom_call.1} parent=1 // pred_region
      %2049 = dma.done [#allocation3], 256
    $region25: #{tpu_custom_call.1} parent=1 // pred_fallthru
      _
    %2050 = vsyncpa [#allocation3], 1

</llo_original>
